<compile_context>
chip_gen: v7x
topology: tpu7x:2x2x1
jax: 0.10.0
libtpu: 0.0.40
codegen_flags: <defaults>
</compile_context>

<pallas_src>
import functools

import jax
import jax.numpy as jnp
import numpy as np
from jax.experimental import pallas as pl
from jax.experimental.pallas import tpu as pltpu


def _round_up(n, m):
    return (n + m - 1) // m * m


def _pad2(a, rows, cols):
    return jnp.pad(a, ((0, rows - a.shape[0]), (0, cols - a.shape[1])))


# Batch-tile cap: at 1024 rows the kernel's VMEM footprint (bf16 staging +
# resident weights + compiler-managed f32 matmul temps) stays well inside even
# v5e's 16 MiB scoped-VMEM default.  Raise together with vmem_limit_bytes if
# you routinely run batches > 1024 and want a single grid step.
_MAX_TILE_B = 1024


@functools.lru_cache(maxsize=None)
def _num_parallel_tcs():
    """2 on v7x (two TensorCores per chip), else 1."""
    try:
        kind = jax.devices()[0].device_kind.lower()
    except Exception:
        return 1
    return 2 if ("v7" in kind or "7x" in kind) else 1


def _pick_tile_b(batch):
    """Pick the batch tile so the grid has exactly `num TCs` parallel steps."""
    steps = _num_parallel_tcs()
    b16 = _round_up(max(batch, 1), 16)          # bf16 sublane packing
    tb = _round_up(-(-b16 // steps), 16)
    return max(16, min(tb, _MAX_TILE_B))


# ----------------------------- Pallas kernel ------------------------------ #
def actor_kernel(x_ref, w1_ref, b1_ref, w2_ref, b2_ref, w3_ref, b3_ref,
                 o_ref, h1_ref, h2_ref):
    # Layer 1: cast x to bf16 in-kernel; K=3 contraction on the MXU
    # (Mosaic zero-pads unaligned contraction dims), f32 accumulate,
    # bias + ReLU on the VPU, stage result in bf16 scratch.
    x = x_ref[...].astype(jnp.bfloat16)
    h1 = jnp.dot(x, w1_ref[...], preferred_element_type=jnp.float32)
    h1_ref[...] = jnp.maximum(h1 + b1_ref[...], 0.0).astype(jnp.bfloat16)

    # Layer 2: bf16 activations straight from scratch, f32 accumulate.
    h2 = jnp.dot(h1_ref[...], w2_ref[...], preferred_element_type=jnp.float32)
    h2_ref[...] = jnp.maximum(h2 + b2_ref[...], 0.0).astype(jnp.bfloat16)

    # Output layer: lane-aligned N=128 matmul, then slice to the real action
    # width before bias + tanh (EUP) + store -> tiny writeback.
    out = jnp.dot(h2_ref[...], w3_ref[...], preferred_element_type=jnp.float32)
    a = o_ref.shape[-1]
    o_ref[...] = jnp.tanh(out[:, :a] + b3_ref[...])


# ------------------------- parameter preparation -------------------------- #
def init_actor_params(key, state_size=3, action_size=1, hidden_size=(400, 300)):
    """Mirrors Actor.__init__/reset_parameters init scheme (synthetic, JAX PRNG)."""
    sizes = [state_size, *hidden_size, action_size]
    params = []
    keys = jax.random.split(key, 2 * (len(sizes) - 1))
    for li in range(len(sizes) - 1):
        fan_in, fan_out = sizes[li], sizes[li + 1]
        wk, bk = keys[2 * li], keys[2 * li + 1]
        if li < len(sizes) - 2:
            # kaiming_uniform_(mode='fan_in', nonlinearity='relu')
            bound_w = float(np.sqrt(6.0 / fan_in))
        else:
            # last layer: uniform(-0.003, 0.003)
            bound_w = 0.003
        w = jax.random.uniform(wk, (fan_in, fan_out), jnp.float32, -bound_w, bound_w)
        bound_b = float(1.0 / np.sqrt(fan_in))  # nn.Linear default bias init
        b = jax.random.uniform(bk, (fan_out,), jnp.float32, -bound_b, bound_b)
        params.append((w, b))
    return params


def prepare_actor_params(params):
    """Pad + cast the weights ONCE (hoisted out of the per-call path).

    Weights -> bf16 (MXU-native), biases -> f32.  The state dim (K=3) is left
    unpadded (Mosaic pads the contraction), hidden lane dims are padded to
    multiples of 128, and w3 keeps a lane-aligned 128-wide N that is sliced
    in-kernel.  b3 is stored at the true action width.
    """
    (w1, b1), (w2, b2), (w3, b3) = params
    S = w1.shape[0]
    H1p = _round_up(w1.shape[1], 128)
    H2p = _round_up(w2.shape[1], 128)
    Np = _round_up(w3.shape[1], 128)

    w1p = _pad2(w1, S, H1p).astype(jnp.bfloat16)
    b1p = _pad2(b1[None, :], 1, H1p).astype(jnp.float32)
    w2p = _pad2(w2, H1p, H2p).astype(jnp.bfloat16)
    b2p = _pad2(b2[None, :], 1, H2p).astype(jnp.float32)
    w3p = _pad2(w3, H2p, Np).astype(jnp.bfloat16)
    b3p = b3[None, :].astype(jnp.float32)          # (1, action_size), unpadded
    return tuple(jax.device_put(a) for a in (w1p, b1p, w2p, b2p, w3p, b3p))


# ------------------------------ forward pass ------------------------------ #
@functools.partial(jax.jit, static_argnames=("action_size", "tile_b"))
def actor_forward(x, padded_params, *, action_size, tile_b=None):
    """x: (B, state_size) f32 -> (B, action_size) f32.

    tile_b: batch tile; by default chosen so the grid has one step per
    TensorCore (1 on v5e/v6e, 2 on v7x), capped for VMEM safety.
    """
    w1p, b1p, w2p, b2p, w3p, b3p = padded_params
    B, S = x.shape
    H1p = w1p.shape[1]
    H2p = w2p.shape[1]
    Np = w3p.shape[1]

    tb = tile_b if tile_b is not None else _pick_tile_b(B)
    Bp = _round_up(B, tb)
    if Bp != B:                                   # only pad ragged batches
        x = jnp.pad(x, ((0, Bp - B), (0, 0)))

    flops = 2 * Bp * (S * H1p + H1p * H2p + H2p * Np)
    bytes_accessed = (Bp * S * 4
                      + (w1p.size + w2p.size + w3p.size) * 2
                      + (b1p.size + b2p.size + b3p.size) * 4
                      + Bp * action_size * 4)
    cost = pl.CostEstimate(flops=flops, transcendentals=Bp * action_size,
                           bytes_accessed=bytes_accessed)

    out_p = pl.pallas_call(
        actor_kernel,
        out_shape=jax.ShapeDtypeStruct((Bp, action_size), jnp.float32),
        grid_spec=pltpu.PrefetchScalarGridSpec(
            num_scalar_prefetch=0,
            grid=(Bp // tb,),
            in_specs=[
                pl.BlockSpec((tb, S), lambda i: (i, 0)),            # x tile (f32)
                pl.BlockSpec((S, H1p), lambda i: (0, 0)),           # w1 (resident)
                pl.BlockSpec((1, H1p), lambda i: (0, 0)),           # b1
                pl.BlockSpec((H1p, H2p), lambda i: (0, 0)),         # w2 (resident)
                pl.BlockSpec((1, H2p), lambda i: (0, 0)),           # b2
                pl.BlockSpec((H2p, Np), lambda i: (0, 0)),          # w3 (resident)
                pl.BlockSpec((1, action_size), lambda i: (0, 0)),   # b3
            ],
            out_specs=pl.BlockSpec((tb, action_size), lambda i: (i, 0)),
            scratch_shapes=[
                pltpu.VMEM((tb, H1p), jnp.bfloat16),  # h1 staging (bf16)
                pltpu.VMEM((tb, H2p), jnp.bfloat16),  # h2 staging (bf16)
            ],
        ),
        compiler_params=pltpu.CompilerParams(
            dimension_semantics=("parallel",),  # batch grid shards across TCs
        ),
        cost_estimate=cost,
    )(x, w1p, b1p, w2p, b2p, w3p, b3p)

    if Bp != B:
        out_p = out_p[:B]
    return out_p


# ------------------------------- references -------------------------------- #
def actor_ref_f32(x, params):
    (w1, b1), (w2, b2), (w3, b3) = params
    h = jnp.maximum(x @ w1 + b1, 0.0)
    h = jnp.maximum(h @ w2 + b2, 0.0)
    return jnp.tanh(h @ w3 + b3)


def actor_ref_bf16(x, params):
    """Mirrors the kernel's numerics: bf16 matmul inputs, f32 accumulation."""
    (w1, b1), (w2, b2), (w3, b3) = params
    bf = jnp.bfloat16
    h = jnp.maximum(jnp.dot(x.astype(bf), w1.astype(bf),
                            preferred_element_type=jnp.float32) + b1, 0.0)
    h = jnp.maximum(jnp.dot(h.astype(bf), w2.astype(bf),
                            preferred_element_type=jnp.float32) + b2, 0.0)
    return jnp.tanh(jnp.dot(h.astype(bf), w3.astype(bf),
                            preferred_element_type=jnp.float32) + b3)


if __name__ == "__main__":
    key = jax.random.PRNGKey(0)
    pkey, xkey1, xkey2 = jax.random.split(key, 3)

    state_size, action_size, hidden_size = 3, 1, (400, 300)
    params = init_actor_params(pkey, state_size, action_size, hidden_size)
    padded = prepare_actor_params(params)   # pad + cast once, outside call path

    # Moderate batch: single grid step on v5e/v6e, two parallel steps on v7x.
    x_big = jax.random.normal(xkey1, (128, state_size), jnp.float32)
    out_big = jax.block_until_ready(
        actor_forward(x_big, padded, action_size=action_size))

    # Ragged small batch: exercises the batch-padding path.
    x_small = jax.random.normal(xkey2, (5, state_size), jnp.float32)
    out_small = jax.block_until_ready(
        actor_forward(x_small, padded, action_size=action_size))

    for x, out in ((x_big, out_big), (x_small, out_small)):
        assert out.shape == (x.shape[0], action_size)
        ref_bf = jax.block_until_ready(actor_ref_bf16(x, params))
        np.testing.assert_allclose(np.asarray(out), np.asarray(ref_bf),
                                   rtol=2e-2, atol=2e-4)
        ref_f32 = jax.block_until_ready(actor_ref_f32(x, params))
        np.testing.assert_allclose(np.asarray(out), np.asarray(ref_f32),
                                   rtol=5e-2, atol=5e-3)

    print("KERNEL_OK")
</pallas_src>

<mosaic_0001>
module attributes {stable_mosaic.version = 11 : i64} {
  func.func @actor_kernel(%arg0: i32, %arg1: memref<128x3xf32, #tpu.memory_space<vmem>>, %arg2: memref<3x512xbf16, #tpu.memory_space<vmem>>, %arg3: memref<1x512xf32, #tpu.memory_space<vmem>>, %arg4: memref<512x384xbf16, #tpu.memory_space<vmem>>, %arg5: memref<1x384xf32, #tpu.memory_space<vmem>>, %arg6: memref<384x128xbf16, #tpu.memory_space<vmem>>, %arg7: memref<1x1xf32, #tpu.memory_space<vmem>>, %arg8: memref<128x1xf32, #tpu.memory_space<vmem>>, %arg9: memref<128x512xbf16, #tpu.memory_space<vmem>>, %arg10: memref<128x384xbf16, #tpu.memory_space<vmem>>) attributes {dimension_semantics = [#tpu.dimension_semantics<parallel>], iteration_bounds = array<i64: 1>, scalar_prefetch = 0 : i64, scratch_operands = 2 : i64, tpu.core_type = #tpu.core_type<tc>, window_params = [{transform_indices = @transform_0, window_bounds = array<i64: 128, 3>}, {pipeline_mode = #tpu.pipeline_mode<synchronous>, transform_indices = @transform_1, window_bounds = array<i64: 3, 512>}, {pipeline_mode = #tpu.pipeline_mode<synchronous>, transform_indices = @transform_2, window_bounds = array<i64: 1, 512>}, {pipeline_mode = #tpu.pipeline_mode<synchronous>, transform_indices = @transform_3, window_bounds = array<i64: 512, 384>}, {pipeline_mode = #tpu.pipeline_mode<synchronous>, transform_indices = @transform_4, window_bounds = array<i64: 1, 384>}, {pipeline_mode = #tpu.pipeline_mode<synchronous>, transform_indices = @transform_5, window_bounds = array<i64: 384, 128>}, {pipeline_mode = #tpu.pipeline_mode<synchronous>, transform_indices = @transform_6, window_bounds = array<i64: 1, 1>}, {transform_indices = @transform_7, window_bounds = array<i64: 128, 1>}]} {
    %c0 = arith.constant 0 : index
    %c0_0 = arith.constant 0 : index
    %0 = vector.load %arg1[%c0, %c0_0] : memref<128x3xf32, #tpu.memory_space<vmem>>, vector<128x3xf32>
    %1 = arith.truncf %0 : vector<128x3xf32> to vector<128x3xbf16>
    %c0_1 = arith.constant 0 : index
    %c0_2 = arith.constant 0 : index
    %2 = vector.load %arg2[%c0_1, %c0_2] : memref<3x512xbf16, #tpu.memory_space<vmem>>, vector<3x512xbf16>
    %cst = arith.constant dense<0.000000e+00> : vector<128x512xf32>
    %3 = tpu.matmul %1, %2, %cst {dimension_numbers = #tpu.dot_dimension_numbers<[1], [0], [0], [1], [0, 0, 1, 1], [], []>} : vector<128x3xbf16>, vector<3x512xbf16>, vector<128x512xf32> -> vector<128x512xf32>
    %c0_3 = arith.constant 0 : index
    %c0_4 = arith.constant 0 : index
    %4 = vector.load %arg3[%c0_3, %c0_4] : memref<1x512xf32, #tpu.memory_space<vmem>>, vector<1x512xf32>
    %5 = vector.broadcast %4 : vector<1x512xf32> to vector<128x512xf32>
    %6 = arith.addf %3, %5 : vector<128x512xf32>
    %cst_5 = arith.constant 0.000000e+00 : f32
    %7 = vector.broadcast %cst_5 : f32 to vector<128x512xf32>
    %8 = arith.maximumf %6, %7 : vector<128x512xf32>
    %9 = arith.truncf %8 : vector<128x512xf32> to vector<128x512xbf16>
    %c0_6 = arith.constant 0 : index
    %c0_7 = arith.constant 0 : index
    %10 = vector.load %arg9[%c0_6, %c0_7] : memref<128x512xbf16, #tpu.memory_space<vmem>>, vector<128x512xbf16>
    tpu.vector_store %arg9[%c0_6, %c0_7], %9 {strides = array<i32>} : memref<128x512xbf16, #tpu.memory_space<vmem>>, vector<128x512xbf16>,
    %c0_8 = arith.constant 0 : index
    %c0_9 = arith.constant 0 : index
    %11 = vector.load %arg9[%c0_8, %c0_9] : memref<128x512xbf16, #tpu.memory_space<vmem>>, vector<128x512xbf16>
    %c0_10 = arith.constant 0 : index
    %c0_11 = arith.constant 0 : index
    %12 = vector.load %arg4[%c0_10, %c0_11] : memref<512x384xbf16, #tpu.memory_space<vmem>>, vector<512x384xbf16>
    %cst_12 = arith.constant dense<0.000000e+00> : vector<128x384xf32>
    %13 = tpu.matmul %11, %12, %cst_12 {dimension_numbers = #tpu.dot_dimension_numbers<[1], [0], [0], [1], [0, 0, 1, 1], [], []>} : vector<128x512xbf16>, vector<512x384xbf16>, vector<128x384xf32> -> vector<128x384xf32>
    %c0_13 = arith.constant 0 : index
    %c0_14 = arith.constant 0 : index
    %14 = vector.load %arg5[%c0_13, %c0_14] : memref<1x384xf32, #tpu.memory_space<vmem>>, vector<1x384xf32>
    %15 = vector.broadcast %14 : vector<1x384xf32> to vector<128x384xf32>
    %16 = arith.addf %13, %15 : vector<128x384xf32>
    %cst_15 = arith.constant 0.000000e+00 : f32
    %17 = vector.broadcast %cst_15 : f32 to vector<128x384xf32>
    %18 = arith.maximumf %16, %17 : vector<128x384xf32>
    %19 = arith.truncf %18 : vector<128x384xf32> to vector<128x384xbf16>
    %c0_16 = arith.constant 0 : index
    %c0_17 = arith.constant 0 : index
    %20 = vector.load %arg10[%c0_16, %c0_17] : memref<128x384xbf16, #tpu.memory_space<vmem>>, vector<128x384xbf16>
    tpu.vector_store %arg10[%c0_16, %c0_17], %19 {strides = array<i32>} : memref<128x384xbf16, #tpu.memory_space<vmem>>, vector<128x384xbf16>,
    %c0_18 = arith.constant 0 : index
    %c0_19 = arith.constant 0 : index
    %21 = vector.load %arg10[%c0_18, %c0_19] : memref<128x384xbf16, #tpu.memory_space<vmem>>, vector<128x384xbf16>
    %c0_20 = arith.constant 0 : index
    %c0_21 = arith.constant 0 : index
    %22 = vector.load %arg6[%c0_20, %c0_21] : memref<384x128xbf16, #tpu.memory_space<vmem>>, vector<384x128xbf16>
    %cst_22 = arith.constant dense<0.000000e+00> : vector<128x128xf32>
    %23 = tpu.matmul %21, %22, %cst_22 {dimension_numbers = #tpu.dot_dimension_numbers<[1], [0], [0], [1], [0, 0, 1, 1], [], []>} : vector<128x384xbf16>, vector<384x128xbf16>, vector<128x128xf32> -> vector<128x128xf32>
    %24 = vector.extract_strided_slice %23 {offsets = [0, 0], sizes = [128, 1], strides = [1, 1]} : vector<128x128xf32> to vector<128x1xf32>
    %c0_23 = arith.constant 0 : index
    %c0_24 = arith.constant 0 : index
    %25 = vector.load %arg7[%c0_23, %c0_24] : memref<1x1xf32, #tpu.memory_space<vmem>>, vector<1x1xf32>
    %26 = vector.broadcast %25 : vector<1x1xf32> to vector<128x1xf32>
    %27 = arith.addf %24, %26 : vector<128x1xf32>
    %28 = math.tanh %27 : vector<128x1xf32>
    %c0_25 = arith.constant 0 : index
    %c0_26 = arith.constant 0 : index
    %29 = vector.load %arg8[%c0_25, %c0_26] : memref<128x1xf32, #tpu.memory_space<vmem>>, vector<128x1xf32>
    tpu.vector_store %arg8[%c0_25, %c0_26], %28 {strides = array<i32>} : memref<128x1xf32, #tpu.memory_space<vmem>>, vector<128x1xf32>,
    return
  }
  func.func @transform_0(%arg0: i32) -> (i32, i32) {
    %c0_i32 = arith.constant 0 : i32
    %c0_i32_0 = arith.constant 0 : i32
    return %arg0, %c0_i32 : i32, i32
  }
  func.func @transform_1(%arg0: i32) -> (i32, i32) {
    %c0_i32 = arith.constant 0 : i32
    %c0_i32_0 = arith.constant 0 : i32
    %c0_i32_1 = arith.constant 0 : i32
    return %c0_i32, %c0_i32_0 : i32, i32
  }
  func.func @transform_2(%arg0: i32) -> (i32, i32) {
    %c0_i32 = arith.constant 0 : i32
    %c0_i32_0 = arith.constant 0 : i32
    %c0_i32_1 = arith.constant 0 : i32
    return %c0_i32, %c0_i32_0 : i32, i32
  }
  func.func @transform_3(%arg0: i32) -> (i32, i32) {
    %c0_i32 = arith.constant 0 : i32
    %c0_i32_0 = arith.constant 0 : i32
    %c0_i32_1 = arith.constant 0 : i32
    return %c0_i32, %c0_i32_0 : i32, i32
  }
  func.func @transform_4(%arg0: i32) -> (i32, i32) {
    %c0_i32 = arith.constant 0 : i32
    %c0_i32_0 = arith.constant 0 : i32
    %c0_i32_1 = arith.constant 0 : i32
    return %c0_i32, %c0_i32_0 : i32, i32
  }
  func.func @transform_5(%arg0: i32) -> (i32, i32) {
    %c0_i32 = arith.constant 0 : i32
    %c0_i32_0 = arith.constant 0 : i32
    %c0_i32_1 = arith.constant 0 : i32
    return %c0_i32, %c0_i32_0 : i32, i32
  }
  func.func @transform_6(%arg0: i32) -> (i32, i32) {
    %c0_i32 = arith.constant 0 : i32
    %c0_i32_0 = arith.constant 0 : i32
    %c0_i32_1 = arith.constant 0 : i32
    return %c0_i32, %c0_i32_0 : i32, i32
  }
  func.func @transform_7(%arg0: i32) -> (i32, i32) {
    %c0_i32 = arith.constant 0 : i32
    %c0_i32_0 = arith.constant 0 : i32
    return %arg0, %c0_i32 : i32, i32
  }
}

</mosaic_0001>

<llo_original>
// kernel: actor_forward.1
$region0: #{actor_forward.1}
  #allocation0 [shape = 'u32[]', space=smem, size = 0x4, offset = 0x4, fixed_abs, tag = 'smem constant byte address 0x4 - core index']
  #allocation1 [shape = 'u32[144,128]{1,0:T(1,128)}', space=vmem, size = 0x12000, scoped, tag = 'internal scratch']
  #allocation2 [shape = 'bf16[128,512]{1,0:T(16,128)(2,1)}', space=vmem, size = 0x20000, scoped, tag = 'scratch operand']
  #allocation3 [shape = 'bf16[128,384]{1,0:T(16,128)(2,1)}', space=vmem, size = 0x18000, scoped, tag = 'scratch operand']
  #allocation4 [shape = 'f32[1,1]{1,0:T(1,128)S(1)}', space=vmem, size = 0x200, scoped, tag = 'scoped memory for actor_forward.1']
  %s0 = inlined_call_operand.vmem [shape: f32[128,3], index: 0, kind: input, shape index: {}]
  %s1 = inlined_call_operand.vmem [shape: bf16[3,512], index: 1, kind: input, shape index: {}]
  %s2 = inlined_call_operand.vmem [shape: f32[1,512], index: 2, kind: input, shape index: {}]
  %s3 = inlined_call_operand.hbm [shape: bf16[512,384], index: 3, kind: input, shape index: {}]
  %s4 = inlined_call_operand.vmem [shape: f32[1,384], index: 4, kind: input, shape index: {}]
  %s5 = inlined_call_operand.hbm [shape: bf16[384,128], index: 5, kind: input, shape index: {}]
  %s6 = inlined_call_operand.<no memory space> [shape: f32[1,1], index: 6, kind: input, shape index: {}]
  %s7 = inlined_call_operand.vmem [shape: f32[128,1], index: 7, kind: output, shape index: {}]
  %s8 = sld [smem:[#allocation0]]
  $region46: #{actor_forward.1} parent=0
    _
  %s10 = ssub.s32 1, %s8
  %s11 = scalar_select 0, %s10, %s8
  %v12 = vstv %s6
  %13 = vst [vmem:[#allocation4] sm:$0x1] %v12
  $region1: #{actor_forward.1} parent=0
    #allocation5 [shape = 'u8[393216]{0}', space=vmem, size = 0x60000, scoped, tag = 'input window, operand 3, single buffered']
    #allocation6 [shape = 's32[1]{0}', space=sflag, size = 0x4, scoped, tag = 'scoped memory for actor_forward.1']
    #allocation7 [shape = 'u8[98304]{0}', space=vmem, size = 0x18000, scoped, tag = 'input window, operand 5, single buffered']
    #allocation8 [shape = 's32[1]{0}', space=sflag, size = 0x4, scoped, tag = 'scoped memory for actor_forward.1']
    %14 = vsyncpa [#allocation6], 0
    %15 = vsyncpa [#allocation8], 0
    // Predicated region
    $region2: #{actor_forward.1} parent=1 // pred_check
      _
    $region3: #{actor_forward.1} parent=1 // pred_check_branch
      %17 = sbr.rel (0) target = $region5
    $region4: #{actor_forward.1} parent=1 // pred_region
      _
    $region5: #{actor_forward.1} parent=1 // pred_fallthru
      _
    // Predicated region
    $region6: #{actor_forward.1} parent=1 // pred_check
      _
    $region7: #{actor_forward.1} parent=1 // pred_check_branch
      %19 = sbr.rel (0) target = $region9
    $region8: #{actor_forward.1} parent=1 // pred_region
      _
    $region9: #{actor_forward.1} parent=1 // pred_fallthru
      _
    // Predicated region
    $region10: #{actor_forward.1} parent=1 // pred_check
      _
    $region11: #{actor_forward.1} parent=1 // pred_check_branch
      %21 = sbr.rel (0) target = $region13
    $region12: #{actor_forward.1} parent=1 // pred_region
      _
    $region13: #{actor_forward.1} parent=1 // pred_fallthru
      _
    // Predicated region
    $region14: #{actor_forward.1} parent=1 // pred_check
      _
    $region15: #{actor_forward.1} parent=1 // pred_check_branch
      %23 = sbr.rel (0) target = $region17
    $region16: #{actor_forward.1} parent=1 // pred_region
      %s25 = ssub.s32 12288, 12288
      %26 = vsyncadd [#allocation6], %s25
      %s27 = sshll.u32 [#allocation5], 4
      %s28 = int_to_ptr.vmem [resolvable:$true] %s27
      %33 = dma.hbm_to_vmem [thread:$0]  %s3, 12288, %s28, [#allocation6], 192, 192, 12
    $region17: #{actor_forward.1} parent=1 // pred_fallthru
      _
    // Predicated region
    $region18: #{actor_forward.1} parent=1 // pred_check
      _
    $region19: #{actor_forward.1} parent=1 // pred_check_branch
      %35 = sbr.rel (0) target = $region21
    $region20: #{actor_forward.1} parent=1 // pred_region
      _
    $region21: #{actor_forward.1} parent=1 // pred_fallthru
      _
    // Predicated region
    $region22: #{actor_forward.1} parent=1 // pred_check
      _
    $region23: #{actor_forward.1} parent=1 // pred_check_branch
      %37 = sbr.rel (0) target = $region25
    $region24: #{actor_forward.1} parent=1 // pred_region
      %s39 = ssub.s32 3072, 3072
      %40 = vsyncadd [#allocation8], %s39
      %s41 = sshll.u32 [#allocation7], 4
      %s42 = int_to_ptr.vmem [resolvable:$true] %s41
      %47 = dma.hbm_to_vmem [thread:$0]  %s5, 3072, %s42, [#allocation8], 64, 64, 4
    $region25: #{actor_forward.1} parent=1 // pred_fallthru
      _
    // Predicated region
    $region26: #{actor_forward.1} parent=1 // pred_check
      _
    $region27: #{actor_forward.1} parent=1 // pred_check_branch
      %49 = sbr.rel (0) target = $region29
    $region28: #{actor_forward.1} parent=1 // pred_region
      _
    $region29: #{actor_forward.1} parent=1 // pred_fallthru
      _
    // Predicated region
    $region30: #{actor_forward.1} parent=1 // pred_check
      _
    $region31: #{actor_forward.1} parent=1 // pred_check_branch
      %51 = sbr.rel (0) target = $region33
    $region32: #{actor_forward.1} parent=1 // pred_region
      %52 = dma.done [#allocation6], 12288
    $region33: #{actor_forward.1} parent=1 // pred_fallthru
      _
    // Predicated region
    $region34: #{actor_forward.1} parent=1 // pred_check
      _
    $region35: #{actor_forward.1} parent=1 // pred_check_branch
      %54 = sbr.rel (0) target = $region37
    $region36: #{actor_forward.1} parent=1 // pred_region
      %55 = dma.done [#allocation8], 3072
    $region37: #{actor_forward.1} parent=1 // pred_fallthru
      _
    %v57 = vld [vmem:[%s0] sm:$0xff]
    %v58 = vld [vmem:[%s0 + $0x8] sm:$0xff]
    %v59 = vld [vmem:[%s0 + $0x10] sm:$0xff]
    %v60 = vld [vmem:[%s0 + $0x18] sm:$0xff]
    %v61 = vld [vmem:[%s0 + $0x20] sm:$0xff]
    %v62 = vld [vmem:[%s0 + $0x28] sm:$0xff]
    %v63 = vld [vmem:[%s0 + $0x30] sm:$0xff]
    %v64 = vld [vmem:[%s0 + $0x38] sm:$0xff]
    %v65 = vld [vmem:[%s0 + $0x40] sm:$0xff]
    %v66 = vld [vmem:[%s0 + $0x48] sm:$0xff]
    %v67 = vld [vmem:[%s0 + $0x50] sm:$0xff]
    %v68 = vld [vmem:[%s0 + $0x58] sm:$0xff]
    %v69 = vld [vmem:[%s0 + $0x60] sm:$0xff]
    %v70 = vld [vmem:[%s0 + $0x68] sm:$0xff]
    %v71 = vld [vmem:[%s0 + $0x70] sm:$0xff]
    %v72 = vld [vmem:[%s0 + $0x78] sm:$0xff]
    %v73 = vpack.c.bf16 %v58, %v57
    %v74 = vpack.c.bf16 %v60, %v59
    %v75 = vpack.c.bf16 %v62, %v61
    %v76 = vpack.c.bf16 %v64, %v63
    %v77 = vpack.c.bf16 %v66, %v65
    %v78 = vpack.c.bf16 %v68, %v67
    %v79 = vpack.c.bf16 %v70, %v69
    %v80 = vpack.c.bf16 %v72, %v71
    %v81 = vld [vmem:[%s1] sm:$0xff]
    %v82 = vld [vmem:[%s2] sm:$0xf]
    %v84 = vlaneseq
    %v85 = vshrl.u32 %v84, 7
    %v86 = vsub.s32 0, %v85
    %v87 = vrot.slane %v82, %v86
    %v88 = vlaneseq
    %v89 = vshrl.u32 %v88, 7
    %v90 = vsub.s32 1, %v89
    %v91 = vrot.slane %v82, %v90
    %v92 = vlaneseq
    %v93 = vshrl.u32 %v92, 7
    %v94 = vsub.s32 2, %v93
    %v95 = vrot.slane %v82, %v94
    %v96 = vlaneseq
    %v97 = vshrl.u32 %v96, 7
    %v98 = vsub.s32 3, %v97
    %v99 = vrot.slane %v82, %v98
    %v105 = vcombine.high %v81, %v81
    %v107 = vunpack.c.l.s4 1983009808
    %v108 = vunpack.c.0.s8 %v107
    %v109 = vlaneseq
    %v110 = vshrl.u32 %v109, 7
    %v111 = vsub.s32 %v108, %v110
    %v112 = vrot.slane %v81, %v111
    %v114 = vunpack.c.l.s4 1983009808
    %v115 = vunpack.c.0.s8 %v114
    %v116 = vlaneseq
    %v117 = vshrl.u32 %v116, 7
    %v118 = vsub.s32 %v115, %v117
    %v119 = vrot.slane %v105, %v118
    %v120 = vcombine.high %v112, %v112
    %v121 = vcombine.high %v119, %v119
    %vm122 = vcmask 23552
    %v124 = vsel %vm122, %v73, 0
    %v127 = vsel %vm122, %v74, 0
    %v130 = vsel %vm122, %v75, 0
    %v133 = vsel %vm122, %v76, 0
    %v136 = vsel %vm122, %v77, 0
    %v139 = vsel %vm122, %v78, 0
    %v142 = vsel %vm122, %v79, 0
    %v145 = vsel %vm122, %v80, 0
    %vm147 = vcmask 1040384
    %vm148 = vcmask 1041408
    %v149 = vsel %vm147, 4294967295, 65535
    %v150 = vsel %vm148, %v149, 0
    %v152 = vand.u32 %v112, %v150
    %v155 = vand.u32 %v120, %v150
    %v158 = vand.u32 %v119, %v150
    %v161 = vand.u32 %v121, %v150
    %163 = vmatprep.subr.bf16.mxu0 %v155
    %164 = vmatpush1.bf16.msra.mxu0 %v152
    %165 = vmatprep.subr.bf16.mxu0 0
    %166 = vmatpush1.bf16.msra.mxu0 0
    %167 = vmatprep.subr.bf16.mxu0 0
    %168 = vmatpush1.bf16.msra.mxu0 0
    %169 = vmatprep.subr.bf16.mxu0 0
    %170 = vmatpush1.bf16.msra.mxu0 0
    %171 = vmatprep.subr.bf16.mxu0 0
    %172 = vmatpush1.bf16.msra.mxu0 0
    %173 = vmatprep.subr.bf16.mxu0 0
    %174 = vmatpush1.bf16.msra.mxu0 0
    %175 = vmatprep.subr.bf16.mxu0 0
    %176 = vmatpush1.bf16.msra.mxu0 0
    %177 = vmatprep.subr.bf16.mxu0 0
    %178 = vmatpush1.bf16.msra.mxu0 0
    %179 = vmatprep.subr.bf16.mxu0 0
    %180 = vmatpush1.bf16.msra.mxu0 0
    %181 = vmatprep.subr.bf16.mxu0 0
    %182 = vmatpush1.bf16.msra.mxu0 0
    %183 = vmatprep.subr.bf16.mxu0 0
    %184 = vmatpush1.bf16.msra.mxu0 0
    %185 = vmatprep.subr.bf16.mxu0 0
    %186 = vmatpush1.bf16.msra.mxu0 0
    %187 = vmatprep.subr.bf16.mxu0 0
    %188 = vmatpush1.bf16.msra.mxu0 0
    %189 = vmatprep.subr.bf16.mxu0 0
    %190 = vmatpush1.bf16.msra.mxu0 0
    %191 = vmatprep.subr.bf16.mxu0 0
    %192 = vmatpush1.bf16.msra.mxu0 0
    %193 = vmatprep.subr.bf16.mxu0 0
    %194 = vmatpush1.bf16.msra.mxu0 0
    %195 = vmatprep.mubr.bf16.mxu0 0
    %196 = vmatmul.mubr.bf16.gmra.mrb[0].mxu0 %v124
    %v197 = vpop.f32.mrb[0].mxu0
    %v198 = vadd.f32 %v87, %v197
    %v199 = vpop.f32.mrb[0].mxu0
    %v200 = vadd.f32 %v91, %v199
    %v201 = vpop.f32.mrb[0].mxu0
    %v202 = vadd.f32 %v87, %v201
    %v203 = vpop.f32.mrb[0].mxu0
    %v204 = vadd.f32 %v91, %v203
    %205 = vmatprep.mubr.bf16.mxu0 0
    %206 = vmatmul.mubr.bf16.gmra.mrb[0].mxu0 %v127
    %v207 = vpop.f32.mrb[0].mxu0
    %v208 = vadd.f32 %v87, %v207
    %v209 = vpop.f32.mrb[0].mxu0
    %v210 = vadd.f32 %v91, %v209
    %v211 = vpop.f32.mrb[0].mxu0
    %v212 = vadd.f32 %v87, %v211
    %v213 = vpop.f32.mrb[0].mxu0
    %v214 = vadd.f32 %v91, %v213
    %215 = vmatprep.mubr.bf16.mxu0 0
    %216 = vmatmul.mubr.bf16.gmra.mrb[0].mxu0 %v130
    %v217 = vpop.f32.mrb[0].mxu0
    %v218 = vadd.f32 %v87, %v217
    %v219 = vpop.f32.mrb[0].mxu0
    %v220 = vadd.f32 %v91, %v219
    %v221 = vpop.f32.mrb[0].mxu0
    %v222 = vadd.f32 %v87, %v221
    %v223 = vpop.f32.mrb[0].mxu0
    %v224 = vadd.f32 %v91, %v223
    %225 = vmatprep.mubr.bf16.mxu0 0
    %226 = vmatmul.mubr.bf16.gmra.mrb[0].mxu0 %v133
    %v227 = vpop.f32.mrb[0].mxu0
    %v228 = vadd.f32 %v87, %v227
    %v229 = vpop.f32.mrb[0].mxu0
    %v230 = vadd.f32 %v91, %v229
    %v231 = vpop.f32.mrb[0].mxu0
    %v232 = vadd.f32 %v87, %v231
    %v233 = vpop.f32.mrb[0].mxu0
    %v234 = vadd.f32 %v91, %v233
    %235 = vmatprep.mubr.bf16.mxu0 0
    %236 = vmatmul.mubr.bf16.gmra.mrb[0].mxu0 %v136
    %v237 = vpop.f32.mrb[0].mxu0
    %v238 = vadd.f32 %v87, %v237
    %v239 = vpop.f32.mrb[0].mxu0
    %v240 = vadd.f32 %v91, %v239
    %v241 = vpop.f32.mrb[0].mxu0
    %v242 = vadd.f32 %v87, %v241
    %v243 = vpop.f32.mrb[0].mxu0
    %v244 = vadd.f32 %v91, %v243
    %245 = vmatprep.mubr.bf16.mxu0 0
    %246 = vmatmul.mubr.bf16.gmra.mrb[0].mxu0 %v139
    %v247 = vpop.f32.mrb[0].mxu0
    %v248 = vadd.f32 %v87, %v247
    %v249 = vpop.f32.mrb[0].mxu0
    %v250 = vadd.f32 %v91, %v249
    %v251 = vpop.f32.mrb[0].mxu0
    %v252 = vadd.f32 %v87, %v251
    %v253 = vpop.f32.mrb[0].mxu0
    %v254 = vadd.f32 %v91, %v253
    %255 = vmatprep.mubr.bf16.mxu0 0
    %256 = vmatmul.mubr.bf16.gmra.mrb[0].mxu0 %v142
    %v257 = vpop.f32.mrb[0].mxu0
    %v258 = vadd.f32 %v87, %v257
    %v259 = vpop.f32.mrb[0].mxu0
    %v260 = vadd.f32 %v91, %v259
    %v261 = vpop.f32.mrb[0].mxu0
    %v262 = vadd.f32 %v87, %v261
    %v263 = vpop.f32.mrb[0].mxu0
    %v264 = vadd.f32 %v91, %v263
    %265 = vmatprep.mubr.bf16.mxu0 0
    %266 = vmatmul.mubr.bf16.gmra.mrb[0].mxu0 %v145
    %v267 = vpop.f32.mrb[0].mxu0
    %v268 = vadd.f32 %v87, %v267
    %v269 = vpop.f32.mrb[0].mxu0
    %v270 = vadd.f32 %v91, %v269
    %v271 = vpop.f32.mrb[0].mxu0
    %v272 = vadd.f32 %v87, %v271
    %v273 = vpop.f32.mrb[0].mxu0
    %v274 = vadd.f32 %v91, %v273
    %275 = vdwg.mxu0
    %276 = vmatprep.subr.bf16.mxu0 %v161
    %277 = vmatpush1.bf16.msra.mxu0 %v158
    %278 = vmatprep.subr.bf16.mxu0 0
    %279 = vmatpush1.bf16.msra.mxu0 0
    %280 = vmatprep.subr.bf16.mxu0 0
    %281 = vmatpush1.bf16.msra.mxu0 0
    %282 = vmatprep.subr.bf16.mxu0 0
    %283 = vmatpush1.bf16.msra.mxu0 0
    %284 = vmatprep.subr.bf16.mxu0 0
    %285 = vmatpush1.bf16.msra.mxu0 0
    %286 = vmatprep.subr.bf16.mxu0 0
    %287 = vmatpush1.bf16.msra.mxu0 0
    %288 = vmatprep.subr.bf16.mxu0 0
    %289 = vmatpush1.bf16.msra.mxu0 0
    %290 = vmatprep.subr.bf16.mxu0 0
    %291 = vmatpush1.bf16.msra.mxu0 0
    %292 = vmatprep.subr.bf16.mxu0 0
    %293 = vmatpush1.bf16.msra.mxu0 0
    %294 = vmatprep.subr.bf16.mxu0 0
    %295 = vmatpush1.bf16.msra.mxu0 0
    %296 = vmatprep.subr.bf16.mxu0 0
    %297 = vmatpush1.bf16.msra.mxu0 0
    %298 = vmatprep.subr.bf16.mxu0 0
    %299 = vmatpush1.bf16.msra.mxu0 0
    %300 = vmatprep.subr.bf16.mxu0 0
    %301 = vmatpush1.bf16.msra.mxu0 0
    %302 = vmatprep.subr.bf16.mxu0 0
    %303 = vmatpush1.bf16.msra.mxu0 0
    %304 = vmatprep.subr.bf16.mxu0 0
    %305 = vmatpush1.bf16.msra.mxu0 0
    %306 = vmatprep.subr.bf16.mxu0 0
    %307 = vmatpush1.bf16.msra.mxu0 0
    %308 = vmatprep.mubr.bf16.mxu0 0
    %309 = vmatmul.mubr.bf16.gmra.mrb[0].mxu0 %v124
    %v310 = vpop.f32.mrb[0].mxu0
    %v311 = vadd.f32 %v95, %v310
    %v312 = vpop.f32.mrb[0].mxu0
    %v313 = vadd.f32 %v99, %v312
    %v314 = vpop.f32.mrb[0].mxu0
    %v315 = vadd.f32 %v95, %v314
    %v316 = vpop.f32.mrb[0].mxu0
    %v317 = vadd.f32 %v99, %v316
    %318 = vmatprep.mubr.bf16.mxu0 0
    %319 = vmatmul.mubr.bf16.gmra.mrb[0].mxu0 %v127
    %v320 = vpop.f32.mrb[0].mxu0
    %v321 = vadd.f32 %v95, %v320
    %v322 = vpop.f32.mrb[0].mxu0
    %v323 = vadd.f32 %v99, %v322
    %v324 = vpop.f32.mrb[0].mxu0
    %v325 = vadd.f32 %v95, %v324
    %v326 = vpop.f32.mrb[0].mxu0
    %v327 = vadd.f32 %v99, %v326
    %328 = vmatprep.mubr.bf16.mxu0 0
    %329 = vmatmul.mubr.bf16.gmra.mrb[0].mxu0 %v130
    %v330 = vpop.f32.mrb[0].mxu0
    %v331 = vadd.f32 %v95, %v330
    %v332 = vpop.f32.mrb[0].mxu0
    %v333 = vadd.f32 %v99, %v332
    %v334 = vpop.f32.mrb[0].mxu0
    %v335 = vadd.f32 %v95, %v334
    %v336 = vpop.f32.mrb[0].mxu0
    %v337 = vadd.f32 %v99, %v336
    %338 = vmatprep.mubr.bf16.mxu0 0
    %339 = vmatmul.mubr.bf16.gmra.mrb[0].mxu0 %v133
    %v340 = vpop.f32.mrb[0].mxu0
    %v341 = vadd.f32 %v95, %v340
    %v342 = vpop.f32.mrb[0].mxu0
    %v343 = vadd.f32 %v99, %v342
    %v344 = vpop.f32.mrb[0].mxu0
    %v345 = vadd.f32 %v95, %v344
    %v346 = vpop.f32.mrb[0].mxu0
    %v347 = vadd.f32 %v99, %v346
    %348 = vmatprep.mubr.bf16.mxu0 0
    %349 = vmatmul.mubr.bf16.gmra.mrb[0].mxu0 %v136
    %v350 = vpop.f32.mrb[0].mxu0
    %v351 = vadd.f32 %v95, %v350
    %v352 = vpop.f32.mrb[0].mxu0
    %v353 = vadd.f32 %v99, %v352
    %v354 = vpop.f32.mrb[0].mxu0
    %v355 = vadd.f32 %v95, %v354
    %v356 = vpop.f32.mrb[0].mxu0
    %v357 = vadd.f32 %v99, %v356
    %358 = vmatprep.mubr.bf16.mxu0 0
    %359 = vmatmul.mubr.bf16.gmra.mrb[0].mxu0 %v139
    %v360 = vpop.f32.mrb[0].mxu0
    %v361 = vadd.f32 %v95, %v360
    %v362 = vpop.f32.mrb[0].mxu0
    %v363 = vadd.f32 %v99, %v362
    %v364 = vpop.f32.mrb[0].mxu0
    %v365 = vadd.f32 %v95, %v364
    %v366 = vpop.f32.mrb[0].mxu0
    %v367 = vadd.f32 %v99, %v366
    %368 = vmatprep.mubr.bf16.mxu0 0
    %369 = vmatmul.mubr.bf16.gmra.mrb[0].mxu0 %v142
    %v370 = vpop.f32.mrb[0].mxu0
    %v371 = vadd.f32 %v95, %v370
    %v372 = vpop.f32.mrb[0].mxu0
    %v373 = vadd.f32 %v99, %v372
    %v374 = vpop.f32.mrb[0].mxu0
    %v375 = vadd.f32 %v95, %v374
    %v376 = vpop.f32.mrb[0].mxu0
    %v377 = vadd.f32 %v99, %v376
    %378 = vmatprep.mubr.bf16.mxu0 0
    %379 = vmatmul.mubr.bf16.gmra.mrb[0].mxu0 %v145
    %v380 = vpop.f32.mrb[0].mxu0
    %v381 = vadd.f32 %v95, %v380
    %v382 = vpop.f32.mrb[0].mxu0
    %v383 = vadd.f32 %v99, %v382
    %v384 = vpop.f32.mrb[0].mxu0
    %v385 = vadd.f32 %v95, %v384
    %v386 = vpop.f32.mrb[0].mxu0
    %v387 = vadd.f32 %v99, %v386
    %388 = vdwg.mxu0
    %v389 = vmax.f32 %v198, 0.0
    %v390 = vmax.f32 %v200, 0.0
    %v391 = vmax.f32 %v311, 0.0
    %v392 = vmax.f32 %v313, 0.0
    %v393 = vmax.f32 %v202, 0.0
    %v394 = vmax.f32 %v204, 0.0
    %v395 = vmax.f32 %v315, 0.0
    %v396 = vmax.f32 %v317, 0.0
    %v397 = vmax.f32 %v208, 0.0
    %v398 = vmax.f32 %v210, 0.0
    %v399 = vmax.f32 %v321, 0.0
    %v400 = vmax.f32 %v323, 0.0
    %v401 = vmax.f32 %v212, 0.0
    %v402 = vmax.f32 %v214, 0.0
    %v403 = vmax.f32 %v325, 0.0
    %v404 = vmax.f32 %v327, 0.0
    %v405 = vmax.f32 %v218, 0.0
    %v406 = vmax.f32 %v220, 0.0
    %v407 = vmax.f32 %v331, 0.0
    %v408 = vmax.f32 %v333, 0.0
    %v409 = vmax.f32 %v222, 0.0
    %v410 = vmax.f32 %v224, 0.0
    %v411 = vmax.f32 %v335, 0.0
    %v412 = vmax.f32 %v337, 0.0
    %v413 = vmax.f32 %v228, 0.0
    %v414 = vmax.f32 %v230, 0.0
    %v415 = vmax.f32 %v341, 0.0
    %v416 = vmax.f32 %v343, 0.0
    %v417 = vmax.f32 %v232, 0.0
    %v418 = vmax.f32 %v234, 0.0
    %v419 = vmax.f32 %v345, 0.0
    %v420 = vmax.f32 %v347, 0.0
    %v421 = vmax.f32 %v238, 0.0
    %v422 = vmax.f32 %v240, 0.0
    %v423 = vmax.f32 %v351, 0.0
    %v424 = vmax.f32 %v353, 0.0
    %v425 = vmax.f32 %v242, 0.0
    %v426 = vmax.f32 %v244, 0.0
    %v427 = vmax.f32 %v355, 0.0
    %v428 = vmax.f32 %v357, 0.0
    %v429 = vmax.f32 %v248, 0.0
    %v430 = vmax.f32 %v250, 0.0
    %v431 = vmax.f32 %v361, 0.0
    %v432 = vmax.f32 %v363, 0.0
    %v433 = vmax.f32 %v252, 0.0
    %v434 = vmax.f32 %v254, 0.0
    %v435 = vmax.f32 %v365, 0.0
    %v436 = vmax.f32 %v367, 0.0
    %v437 = vmax.f32 %v258, 0.0
    %v438 = vmax.f32 %v260, 0.0
    %v439 = vmax.f32 %v371, 0.0
    %v440 = vmax.f32 %v373, 0.0
    %v441 = vmax.f32 %v262, 0.0
    %v442 = vmax.f32 %v264, 0.0
    %v443 = vmax.f32 %v375, 0.0
    %v444 = vmax.f32 %v377, 0.0
    %v445 = vmax.f32 %v268, 0.0
    %v446 = vmax.f32 %v270, 0.0
    %v447 = vmax.f32 %v381, 0.0
    %v448 = vmax.f32 %v383, 0.0
    %v449 = vmax.f32 %v272, 0.0
    %v450 = vmax.f32 %v274, 0.0
    %v451 = vmax.f32 %v385, 0.0
    %v452 = vmax.f32 %v387, 0.0
    %v453 = vpack.c.bf16 %v393, %v389
    %v454 = vpack.c.bf16 %v394, %v390
    %v455 = vpack.c.bf16 %v395, %v391
    %v456 = vpack.c.bf16 %v396, %v392
    %v457 = vpack.c.bf16 %v401, %v397
    %v458 = vpack.c.bf16 %v402, %v398
    %v459 = vpack.c.bf16 %v403, %v399
    %v460 = vpack.c.bf16 %v404, %v400
    %v461 = vpack.c.bf16 %v409, %v405
    %v462 = vpack.c.bf16 %v410, %v406
    %v463 = vpack.c.bf16 %v411, %v407
    %v464 = vpack.c.bf16 %v412, %v408
    %v465 = vpack.c.bf16 %v417, %v413
    %v466 = vpack.c.bf16 %v418, %v414
    %v467 = vpack.c.bf16 %v419, %v415
    %v468 = vpack.c.bf16 %v420, %v416
    %v469 = vpack.c.bf16 %v425, %v421
    %v470 = vpack.c.bf16 %v426, %v422
    %v471 = vpack.c.bf16 %v427, %v423
    %v472 = vpack.c.bf16 %v428, %v424
    %v473 = vpack.c.bf16 %v433, %v429
    %v474 = vpack.c.bf16 %v434, %v430
    %v475 = vpack.c.bf16 %v435, %v431
    %v476 = vpack.c.bf16 %v436, %v432
    %v477 = vpack.c.bf16 %v441, %v437
    %v478 = vpack.c.bf16 %v442, %v438
    %v479 = vpack.c.bf16 %v443, %v439
    %v480 = vpack.c.bf16 %v444, %v440
    %v481 = vpack.c.bf16 %v449, %v445
    %v482 = vpack.c.bf16 %v450, %v446
    %v483 = vpack.c.bf16 %v451, %v447
    %v484 = vpack.c.bf16 %v452, %v448
    %485 = vst [vmem:[#allocation2] sm:$0xff] %v453
    %486 = vst [vmem:[#allocation2 + $0x8] sm:$0xff] %v454
    %487 = vst [vmem:[#allocation2 + $0x10] sm:$0xff] %v455
    %488 = vst [vmem:[#allocation2 + $0x18] sm:$0xff] %v456
    %489 = vst [vmem:[#allocation2 + $0x20] sm:$0xff] %v457
    %490 = vst [vmem:[#allocation2 + $0x28] sm:$0xff] %v458
    %491 = vst [vmem:[#allocation2 + $0x30] sm:$0xff] %v459
    %492 = vst [vmem:[#allocation2 + $0x38] sm:$0xff] %v460
    %493 = vst [vmem:[#allocation2 + $0x40] sm:$0xff] %v461
    %494 = vst [vmem:[#allocation2 + $0x48] sm:$0xff] %v462
    %495 = vst [vmem:[#allocation2 + $0x50] sm:$0xff] %v463
    %496 = vst [vmem:[#allocation2 + $0x58] sm:$0xff] %v464
    %497 = vst [vmem:[#allocation2 + $0x60] sm:$0xff] %v465
    %498 = vst [vmem:[#allocation2 + $0x68] sm:$0xff] %v466
    %499 = vst [vmem:[#allocation2 + $0x70] sm:$0xff] %v467
    %500 = vst [vmem:[#allocation2 + $0x78] sm:$0xff] %v468
    %501 = vst [vmem:[#allocation2 + $0x80] sm:$0xff] %v469
    %502 = vst [vmem:[#allocation2 + $0x88] sm:$0xff] %v470
    %503 = vst [vmem:[#allocation2 + $0x90] sm:$0xff] %v471
    %504 = vst [vmem:[#allocation2 + $0x98] sm:$0xff] %v472
    %505 = vst [vmem:[#allocation2 + $0xa0] sm:$0xff] %v473
    %506 = vst [vmem:[#allocation2 + $0xa8] sm:$0xff] %v474
    %507 = vst [vmem:[#allocation2 + $0xb0] sm:$0xff] %v475
    %508 = vst [vmem:[#allocation2 + $0xb8] sm:$0xff] %v476
    %509 = vst [vmem:[#allocation2 + $0xc0] sm:$0xff] %v477
    %510 = vst [vmem:[#allocation2 + $0xc8] sm:$0xff] %v478
    %511 = vst [vmem:[#allocation2 + $0xd0] sm:$0xff] %v479
    %512 = vst [vmem:[#allocation2 + $0xd8] sm:$0xff] %v480
    %513 = vst [vmem:[#allocation2 + $0xe0] sm:$0xff] %v481
    %514 = vst [vmem:[#allocation2 + $0xe8] sm:$0xff] %v482
    %515 = vst [vmem:[#allocation2 + $0xf0] sm:$0xff] %v483
    %516 = vst [vmem:[#allocation2 + $0xf8] sm:$0xff] %v484
    %v517 = vld [vmem:[#allocation2] sm:$0xff]
    %v518 = vld [vmem:[#allocation2 + $0x8] sm:$0xff]
    %v519 = vld [vmem:[#allocation2 + $0x10] sm:$0xff]
    %v520 = vld [vmem:[#allocation2 + $0x18] sm:$0xff]
    %v521 = vld [vmem:[#allocation2 + $0x20] sm:$0xff]
    %v522 = vld [vmem:[#allocation2 + $0x28] sm:$0xff]
    %v523 = vld [vmem:[#allocation2 + $0x30] sm:$0xff]
    %v524 = vld [vmem:[#allocation2 + $0x38] sm:$0xff]
    %v525 = vld [vmem:[#allocation2 + $0x40] sm:$0xff]
    %v526 = vld [vmem:[#allocation2 + $0x48] sm:$0xff]
    %v527 = vld [vmem:[#allocation2 + $0x50] sm:$0xff]
    %v528 = vld [vmem:[#allocation2 + $0x58] sm:$0xff]
    %v529 = vld [vmem:[#allocation2 + $0x60] sm:$0xff]
    %v530 = vld [vmem:[#allocation2 + $0x68] sm:$0xff]
    %v531 = vld [vmem:[#allocation2 + $0x70] sm:$0xff]
    %v532 = vld [vmem:[#allocation2 + $0x78] sm:$0xff]
    %v533 = vld [vmem:[#allocation2 + $0x80] sm:$0xff]
    %v534 = vld [vmem:[#allocation2 + $0x88] sm:$0xff]
    %v535 = vld [vmem:[#allocation2 + $0x90] sm:$0xff]
    %v536 = vld [vmem:[#allocation2 + $0x98] sm:$0xff]
    %v537 = vld [vmem:[#allocation2 + $0xa0] sm:$0xff]
    %v538 = vld [vmem:[#allocation2 + $0xa8] sm:$0xff]
    %v539 = vld [vmem:[#allocation2 + $0xb0] sm:$0xff]
    %v540 = vld [vmem:[#allocation2 + $0xb8] sm:$0xff]
    %v541 = vld [vmem:[#allocation2 + $0xc0] sm:$0xff]
    %v542 = vld [vmem:[#allocation2 + $0xc8] sm:$0xff]
    %v543 = vld [vmem:[#allocation2 + $0xd0] sm:$0xff]
    %v544 = vld [vmem:[#allocation2 + $0xd8] sm:$0xff]
    %v545 = vld [vmem:[#allocation2 + $0xe0] sm:$0xff]
    %v546 = vld [vmem:[#allocation2 + $0xe8] sm:$0xff]
    %v547 = vld [vmem:[#allocation2 + $0xf0] sm:$0xff]
    %v548 = vld [vmem:[#allocation2 + $0xf8] sm:$0xff]
    %v549 = vld [vmem:[#allocation5] sm:$0xff]
    %v550 = vld [vmem:[#allocation5 + $0x8] sm:$0xf]
    %v551 = vld [vmem:[#allocation5 + $0xc] sm:$0xff]
    %v552 = vld [vmem:[#allocation5 + $0x14] sm:$0xf]
    %v553 = vld [vmem:[#allocation5 + $0x18] sm:$0xff]
    %v554 = vld [vmem:[#allocation5 + $0x20] sm:$0xf]
    %v555 = vld [vmem:[#allocation5 + $0x24] sm:$0xff]
    %v556 = vld [vmem:[#allocation5 + $0x2c] sm:$0xf]
    %v557 = vld [vmem:[#allocation5 + $0x30] sm:$0xff]
    %v558 = vld [vmem:[#allocation5 + $0x38] sm:$0xf]
    %v559 = vld [vmem:[#allocation5 + $0x3c] sm:$0xff]
    %v560 = vld [vmem:[#allocation5 + $0x44] sm:$0xf]
    %v561 = vld [vmem:[#allocation5 + $0x48] sm:$0xff]
    %v562 = vld [vmem:[#allocation5 + $0x50] sm:$0xf]
    %v563 = vld [vmem:[#allocation5 + $0x54] sm:$0xff]
    %v564 = vld [vmem:[#allocation5 + $0x5c] sm:$0xf]
    %v565 = vld [vmem:[#allocation5 + $0x60] sm:$0xff]
    %v566 = vld [vmem:[#allocation5 + $0x68] sm:$0xf]
    %v567 = vld [vmem:[#allocation5 + $0x6c] sm:$0xff]
    %v568 = vld [vmem:[#allocation5 + $0x74] sm:$0xf]
    %v569 = vld [vmem:[#allocation5 + $0x78] sm:$0xff]
    %v570 = vld [vmem:[#allocation5 + $0x80] sm:$0xf]
    %v571 = vld [vmem:[#allocation5 + $0x84] sm:$0xff]
    %v572 = vld [vmem:[#allocation5 + $0x8c] sm:$0xf]
    %v573 = vld [vmem:[#allocation5 + $0x90] sm:$0xff]
    %v574 = vld [vmem:[#allocation5 + $0x98] sm:$0xf]
    %v575 = vld [vmem:[#allocation5 + $0x9c] sm:$0xff]
    %v576 = vld [vmem:[#allocation5 + $0xa4] sm:$0xf]
    %v577 = vld [vmem:[#allocation5 + $0xa8] sm:$0xff]
    %v578 = vld [vmem:[#allocation5 + $0xb0] sm:$0xf]
    %v579 = vld [vmem:[#allocation5 + $0xb4] sm:$0xff]
    %v580 = vld [vmem:[#allocation5 + $0xbc] sm:$0xf]
    %v581 = vld [vmem:[#allocation5 + $0xc0] sm:$0xff]
    %v582 = vld [vmem:[#allocation5 + $0xc8] sm:$0xf]
    %v583 = vld [vmem:[#allocation5 + $0xcc] sm:$0xff]
    %v584 = vld [vmem:[#allocation5 + $0xd4] sm:$0xf]
    %v585 = vld [vmem:[#allocation5 + $0xd8] sm:$0xff]
    %v586 = vld [vmem:[#allocation5 + $0xe0] sm:$0xf]
    %v587 = vld [vmem:[#allocation5 + $0xe4] sm:$0xff]
    %v588 = vld [vmem:[#allocation5 + $0xec] sm:$0xf]
    %v589 = vld [vmem:[#allocation5 + $0xf0] sm:$0xff]
    %v590 = vld [vmem:[#allocation5 + $0xf8] sm:$0xf]
    %v591 = vld [vmem:[#allocation5 + $0xfc] sm:$0xff]
    %v592 = vld [vmem:[#allocation5 + $0x104] sm:$0xf]
    %v593 = vld [vmem:[#allocation5 + $0x108] sm:$0xff]
    %v594 = vld [vmem:[#allocation5 + $0x110] sm:$0xf]
    %v595 = vld [vmem:[#allocation5 + $0x114] sm:$0xff]
    %v596 = vld [vmem:[#allocation5 + $0x11c] sm:$0xf]
    %v597 = vld [vmem:[#allocation5 + $0x120] sm:$0xff]
    %v598 = vld [vmem:[#allocation5 + $0x128] sm:$0xf]
    %v599 = vld [vmem:[#allocation5 + $0x12c] sm:$0xff]
    %v600 = vld [vmem:[#allocation5 + $0x134] sm:$0xf]
    %v601 = vld [vmem:[#allocation5 + $0x138] sm:$0xff]
    %v602 = vld [vmem:[#allocation5 + $0x140] sm:$0xf]
    %v603 = vld [vmem:[#allocation5 + $0x144] sm:$0xff]
    %v604 = vld [vmem:[#allocation5 + $0x14c] sm:$0xf]
    %v605 = vld [vmem:[#allocation5 + $0x150] sm:$0xff]
    %v606 = vld [vmem:[#allocation5 + $0x158] sm:$0xf]
    %v607 = vld [vmem:[#allocation5 + $0x15c] sm:$0xff]
    %v608 = vld [vmem:[#allocation5 + $0x164] sm:$0xf]
    %v609 = vld [vmem:[#allocation5 + $0x168] sm:$0xff]
    %v610 = vld [vmem:[#allocation5 + $0x170] sm:$0xf]
    %v611 = vld [vmem:[#allocation5 + $0x174] sm:$0xff]
    %v612 = vld [vmem:[#allocation5 + $0x17c] sm:$0xf]
    %v613 = vld [vmem:[#allocation5 + $0x180] sm:$0xff]
    %v614 = vld [vmem:[#allocation5 + $0x188] sm:$0xf]
    %v615 = vld [vmem:[#allocation5 + $0x18c] sm:$0xff]
    %v616 = vld [vmem:[#allocation5 + $0x194] sm:$0xf]
    %v617 = vld [vmem:[#allocation5 + $0x198] sm:$0xff]
    %v618 = vld [vmem:[#allocation5 + $0x1a0] sm:$0xf]
    %v619 = vld [vmem:[#allocation5 + $0x1a4] sm:$0xff]
    %v620 = vld [vmem:[#allocation5 + $0x1ac] sm:$0xf]
    %v621 = vld [vmem:[#allocation5 + $0x1b0] sm:$0xff]
    %v622 = vld [vmem:[#allocation5 + $0x1b8] sm:$0xf]
    %v623 = vld [vmem:[#allocation5 + $0x1bc] sm:$0xff]
    %v624 = vld [vmem:[#allocation5 + $0x1c4] sm:$0xf]
    %v625 = vld [vmem:[#allocation5 + $0x1c8] sm:$0xff]
    %v626 = vld [vmem:[#allocation5 + $0x1d0] sm:$0xf]
    %v627 = vld [vmem:[#allocation5 + $0x1d4] sm:$0xff]
    %v628 = vld [vmem:[#allocation5 + $0x1dc] sm:$0xf]
    %v629 = vld [vmem:[#allocation5 + $0x1e0] sm:$0xff]
    %v630 = vld [vmem:[#allocation5 + $0x1e8] sm:$0xf]
    %v631 = vld [vmem:[#allocation5 + $0x1ec] sm:$0xff]
    %v632 = vld [vmem:[#allocation5 + $0x1f4] sm:$0xf]
    %v633 = vld [vmem:[#allocation5 + $0x1f8] sm:$0xff]
    %v634 = vld [vmem:[#allocation5 + $0x200] sm:$0xf]
    %v635 = vld [vmem:[#allocation5 + $0x204] sm:$0xff]
    %v636 = vld [vmem:[#allocation5 + $0x20c] sm:$0xf]
    %v637 = vld [vmem:[#allocation5 + $0x210] sm:$0xff]
    %v638 = vld [vmem:[#allocation5 + $0x218] sm:$0xf]
    %v639 = vld [vmem:[#allocation5 + $0x21c] sm:$0xff]
    %v640 = vld [vmem:[#allocation5 + $0x224] sm:$0xf]
    %v641 = vld [vmem:[#allocation5 + $0x228] sm:$0xff]
    %v642 = vld [vmem:[#allocation5 + $0x230] sm:$0xf]
    %v643 = vld [vmem:[#allocation5 + $0x234] sm:$0xff]
    %v644 = vld [vmem:[#allocation5 + $0x23c] sm:$0xf]
    %v645 = vld [vmem:[#allocation5 + $0x240] sm:$0xff]
    %v646 = vld [vmem:[#allocation5 + $0x248] sm:$0xf]
    %v647 = vld [vmem:[#allocation5 + $0x24c] sm:$0xff]
    %v648 = vld [vmem:[#allocation5 + $0x254] sm:$0xf]
    %v649 = vld [vmem:[#allocation5 + $0x258] sm:$0xff]
    %v650 = vld [vmem:[#allocation5 + $0x260] sm:$0xf]
    %v651 = vld [vmem:[#allocation5 + $0x264] sm:$0xff]
    %v652 = vld [vmem:[#allocation5 + $0x26c] sm:$0xf]
    %v653 = vld [vmem:[#allocation5 + $0x270] sm:$0xff]
    %v654 = vld [vmem:[#allocation5 + $0x278] sm:$0xf]
    %v655 = vld [vmem:[#allocation5 + $0x27c] sm:$0xff]
    %v656 = vld [vmem:[#allocation5 + $0x284] sm:$0xf]
    %v657 = vld [vmem:[#allocation5 + $0x288] sm:$0xff]
    %v658 = vld [vmem:[#allocation5 + $0x290] sm:$0xf]
    %v659 = vld [vmem:[#allocation5 + $0x294] sm:$0xff]
    %v660 = vld [vmem:[#allocation5 + $0x29c] sm:$0xf]
    %v661 = vld [vmem:[#allocation5 + $0x2a0] sm:$0xff]
    %v662 = vld [vmem:[#allocation5 + $0x2a8] sm:$0xf]
    %v663 = vld [vmem:[#allocation5 + $0x2ac] sm:$0xff]
    %v664 = vld [vmem:[#allocation5 + $0x2b4] sm:$0xf]
    %v665 = vld [vmem:[#allocation5 + $0x2b8] sm:$0xff]
    %v666 = vld [vmem:[#allocation5 + $0x2c0] sm:$0xf]
    %v667 = vld [vmem:[#allocation5 + $0x2c4] sm:$0xff]
    %v668 = vld [vmem:[#allocation5 + $0x2cc] sm:$0xf]
    %v669 = vld [vmem:[#allocation5 + $0x2d0] sm:$0xff]
    %v670 = vld [vmem:[#allocation5 + $0x2d8] sm:$0xf]
    %v671 = vld [vmem:[#allocation5 + $0x2dc] sm:$0xff]
    %v672 = vld [vmem:[#allocation5 + $0x2e4] sm:$0xf]
    %v673 = vld [vmem:[#allocation5 + $0x2e8] sm:$0xff]
    %v674 = vld [vmem:[#allocation5 + $0x2f0] sm:$0xf]
    %v675 = vld [vmem:[#allocation5 + $0x2f4] sm:$0xff]
    %v676 = vld [vmem:[#allocation5 + $0x2fc] sm:$0xf]
    %v677 = vld [vmem:[%s4] sm:$0x7]
    %v679 = vlaneseq
    %v680 = vshrl.u32 %v679, 7
    %v681 = vsub.s32 0, %v680
    %v682 = vrot.slane %v677, %v681
    %v683 = vlaneseq
    %v684 = vshrl.u32 %v683, 7
    %v685 = vsub.s32 1, %v684
    %v686 = vrot.slane %v677, %v685
    %v687 = vlaneseq
    %v688 = vshrl.u32 %v687, 7
    %v689 = vsub.s32 2, %v688
    %v690 = vrot.slane %v677, %v689
    %v822 = vunpack.c.l.b16 %v549
    %v823 = vunpack.c.h.b16 %v549
    %v824 = vunpack.c.l.b16 %v550
    %v825 = vunpack.c.l.b16 %v551
    %v826 = vunpack.c.h.b16 %v551
    %v827 = vunpack.c.l.b16 %v552
    %v828 = vunpack.c.l.b16 %v553
    %v829 = vunpack.c.h.b16 %v553
    %v830 = vunpack.c.l.b16 %v554
    %v831 = vunpack.c.l.b16 %v555
    %v832 = vunpack.c.h.b16 %v555
    %v833 = vunpack.c.l.b16 %v556
    %v834 = vunpack.c.l.b16 %v557
    %v835 = vunpack.c.h.b16 %v557
    %v836 = vunpack.c.l.b16 %v558
    %v837 = vunpack.c.l.b16 %v559
    %v838 = vunpack.c.h.b16 %v559
    %v839 = vunpack.c.l.b16 %v560
    %v840 = vunpack.c.l.b16 %v561
    %v841 = vunpack.c.h.b16 %v561
    %v842 = vunpack.c.l.b16 %v562
    %v843 = vunpack.c.l.b16 %v563
    %v844 = vunpack.c.h.b16 %v563
    %v845 = vunpack.c.l.b16 %v564
    %v846 = vunpack.c.l.b16 %v565
    %v847 = vunpack.c.h.b16 %v565
    %v848 = vunpack.c.l.b16 %v566
    %v849 = vunpack.c.l.b16 %v567
    %v850 = vunpack.c.h.b16 %v567
    %v851 = vunpack.c.l.b16 %v568
    %v852 = vunpack.c.l.b16 %v569
    %v853 = vunpack.c.h.b16 %v569
    %v854 = vunpack.c.l.b16 %v570
    %v855 = vunpack.c.l.b16 %v571
    %v856 = vunpack.c.h.b16 %v571
    %v857 = vunpack.c.l.b16 %v572
    %v858 = vunpack.c.l.b16 %v573
    %v859 = vunpack.c.h.b16 %v573
    %v860 = vunpack.c.l.b16 %v574
    %v861 = vunpack.c.l.b16 %v575
    %v862 = vunpack.c.h.b16 %v575
    %v863 = vunpack.c.l.b16 %v576
    %v864 = vunpack.c.l.b16 %v577
    %v865 = vunpack.c.h.b16 %v577
    %v866 = vunpack.c.l.b16 %v578
    %v867 = vunpack.c.l.b16 %v579
    %v868 = vunpack.c.h.b16 %v579
    %v869 = vunpack.c.l.b16 %v580
    %v870 = vunpack.c.l.b16 %v581
    %v871 = vunpack.c.h.b16 %v581
    %v872 = vunpack.c.l.b16 %v582
    %v873 = vunpack.c.l.b16 %v583
    %v874 = vunpack.c.h.b16 %v583
    %v875 = vunpack.c.l.b16 %v584
    %v876 = vunpack.c.l.b16 %v585
    %v877 = vunpack.c.h.b16 %v585
    %v878 = vunpack.c.l.b16 %v586
    %v879 = vunpack.c.l.b16 %v587
    %v880 = vunpack.c.h.b16 %v587
    %v881 = vunpack.c.l.b16 %v588
    %v882 = vunpack.c.l.b16 %v589
    %v883 = vunpack.c.h.b16 %v589
    %v884 = vunpack.c.l.b16 %v590
    %v885 = vunpack.c.l.b16 %v591
    %v886 = vunpack.c.h.b16 %v591
    %v887 = vunpack.c.l.b16 %v592
    %v888 = vunpack.c.l.b16 %v593
    %v889 = vunpack.c.h.b16 %v593
    %v890 = vunpack.c.l.b16 %v594
    %v891 = vunpack.c.l.b16 %v595
    %v892 = vunpack.c.h.b16 %v595
    %v893 = vunpack.c.l.b16 %v596
    %v894 = vunpack.c.l.b16 %v597
    %v895 = vunpack.c.h.b16 %v597
    %v896 = vunpack.c.l.b16 %v598
    %v897 = vunpack.c.l.b16 %v599
    %v898 = vunpack.c.h.b16 %v599
    %v899 = vunpack.c.l.b16 %v600
    %v900 = vunpack.c.l.b16 %v601
    %v901 = vunpack.c.h.b16 %v601
    %v902 = vunpack.c.l.b16 %v602
    %v903 = vunpack.c.l.b16 %v603
    %v904 = vunpack.c.h.b16 %v603
    %v905 = vunpack.c.l.b16 %v604
    %v906 = vunpack.c.l.b16 %v605
    %v907 = vunpack.c.h.b16 %v605
    %v908 = vunpack.c.l.b16 %v606
    %v909 = vunpack.c.l.b16 %v607
    %v910 = vunpack.c.h.b16 %v607
    %v911 = vunpack.c.l.b16 %v608
    %v912 = vunpack.c.l.b16 %v609
    %v913 = vunpack.c.h.b16 %v609
    %v914 = vunpack.c.l.b16 %v610
    %v915 = vunpack.c.l.b16 %v611
    %v916 = vunpack.c.h.b16 %v611
    %v917 = vunpack.c.l.b16 %v612
    %v918 = vunpack.c.l.b16 %v613
    %v919 = vunpack.c.h.b16 %v613
    %v920 = vunpack.c.l.b16 %v614
    %v921 = vunpack.c.l.b16 %v615
    %v922 = vunpack.c.h.b16 %v615
    %v923 = vunpack.c.l.b16 %v616
    %v924 = vunpack.c.l.b16 %v617
    %v925 = vunpack.c.h.b16 %v617
    %v926 = vunpack.c.l.b16 %v618
    %v927 = vunpack.c.l.b16 %v619
    %v928 = vunpack.c.h.b16 %v619
    %v929 = vunpack.c.l.b16 %v620
    %v930 = vunpack.c.l.b16 %v621
    %v931 = vunpack.c.h.b16 %v621
    %v932 = vunpack.c.l.b16 %v622
    %v933 = vunpack.c.l.b16 %v623
    %v934 = vunpack.c.h.b16 %v623
    %v935 = vunpack.c.l.b16 %v624
    %v936 = vunpack.c.l.b16 %v625
    %v937 = vunpack.c.h.b16 %v625
    %v938 = vunpack.c.l.b16 %v626
    %v939 = vunpack.c.l.b16 %v627
    %v940 = vunpack.c.h.b16 %v627
    %v941 = vunpack.c.l.b16 %v628
    %v942 = vunpack.c.l.b16 %v629
    %v943 = vunpack.c.h.b16 %v629
    %v944 = vunpack.c.l.b16 %v630
    %v945 = vunpack.c.l.b16 %v631
    %v946 = vunpack.c.h.b16 %v631
    %v947 = vunpack.c.l.b16 %v632
    %v948 = vunpack.c.l.b16 %v633
    %v949 = vunpack.c.h.b16 %v633
    %v950 = vunpack.c.l.b16 %v634
    %v951 = vunpack.c.l.b16 %v635
    %v952 = vunpack.c.h.b16 %v635
    %v953 = vunpack.c.l.b16 %v636
    %v954 = vunpack.c.l.b16 %v637
    %v955 = vunpack.c.h.b16 %v637
    %v956 = vunpack.c.l.b16 %v638
    %v957 = vunpack.c.l.b16 %v639
    %v958 = vunpack.c.h.b16 %v639
    %v959 = vunpack.c.l.b16 %v640
    %v960 = vunpack.c.l.b16 %v641
    %v961 = vunpack.c.h.b16 %v641
    %v962 = vunpack.c.l.b16 %v642
    %v963 = vunpack.c.l.b16 %v643
    %v964 = vunpack.c.h.b16 %v643
    %v965 = vunpack.c.l.b16 %v644
    %v966 = vunpack.c.l.b16 %v645
    %v967 = vunpack.c.h.b16 %v645
    %v968 = vunpack.c.l.b16 %v646
    %v969 = vunpack.c.l.b16 %v647
    %v970 = vunpack.c.h.b16 %v647
    %v971 = vunpack.c.l.b16 %v648
    %v972 = vunpack.c.l.b16 %v649
    %v973 = vunpack.c.h.b16 %v649
    %v974 = vunpack.c.l.b16 %v650
    %v975 = vunpack.c.l.b16 %v651
    %v976 = vunpack.c.h.b16 %v651
    %v977 = vunpack.c.l.b16 %v652
    %v978 = vunpack.c.l.b16 %v653
    %v979 = vunpack.c.h.b16 %v653
    %v980 = vunpack.c.l.b16 %v654
    %v981 = vunpack.c.l.b16 %v655
    %v982 = vunpack.c.h.b16 %v655
    %v983 = vunpack.c.l.b16 %v656
    %v984 = vunpack.c.l.b16 %v657
    %v985 = vunpack.c.h.b16 %v657
    %v986 = vunpack.c.l.b16 %v658
    %v987 = vunpack.c.l.b16 %v659
    %v988 = vunpack.c.h.b16 %v659
    %v989 = vunpack.c.l.b16 %v660
    %v990 = vunpack.c.l.b16 %v661
    %v991 = vunpack.c.h.b16 %v661
    %v992 = vunpack.c.l.b16 %v662
    %v993 = vunpack.c.l.b16 %v663
    %v994 = vunpack.c.h.b16 %v663
    %v995 = vunpack.c.l.b16 %v664
    %v996 = vunpack.c.l.b16 %v665
    %v997 = vunpack.c.h.b16 %v665
    %v998 = vunpack.c.l.b16 %v666
    %v999 = vunpack.c.l.b16 %v667
    %v1000 = vunpack.c.h.b16 %v667
    %v1001 = vunpack.c.l.b16 %v668
    %v1002 = vunpack.c.l.b16 %v669
    %v1003 = vunpack.c.h.b16 %v669
    %v1004 = vunpack.c.l.b16 %v670
    %v1005 = vunpack.c.l.b16 %v671
    %v1006 = vunpack.c.h.b16 %v671
    %v1007 = vunpack.c.l.b16 %v672
    %v1008 = vunpack.c.l.b16 %v673
    %v1009 = vunpack.c.h.b16 %v673
    %v1010 = vunpack.c.l.b16 %v674
    %v1011 = vunpack.c.l.b16 %v675
    %v1012 = vunpack.c.h.b16 %v675
    %v1013 = vunpack.c.l.b16 %v676
    %v1014 = vpack.c.b16 %v825, %v822
    %v1015 = vpack.c.b16 %v826, %v823
    %v1016 = vpack.c.b16 %v827, %v824
    %v1017 = vpack.c.b16 %v831, %v828
    %v1018 = vpack.c.b16 %v832, %v829
    %v1019 = vpack.c.b16 %v833, %v830
    %v1020 = vpack.c.b16 %v837, %v834
    %v1021 = vpack.c.b16 %v838, %v835
    %v1022 = vpack.c.b16 %v839, %v836
    %v1023 = vpack.c.b16 %v843, %v840
    %v1024 = vpack.c.b16 %v844, %v841
    %v1025 = vpack.c.b16 %v845, %v842
    %v1026 = vpack.c.b16 %v849, %v846
    %v1027 = vpack.c.b16 %v850, %v847
    %v1028 = vpack.c.b16 %v851, %v848
    %v1029 = vpack.c.b16 %v855, %v852
    %v1030 = vpack.c.b16 %v856, %v853
    %v1031 = vpack.c.b16 %v857, %v854
    %v1032 = vpack.c.b16 %v861, %v858
    %v1033 = vpack.c.b16 %v862, %v859
    %v1034 = vpack.c.b16 %v863, %v860
    %v1035 = vpack.c.b16 %v867, %v864
    %v1036 = vpack.c.b16 %v868, %v865
    %v1037 = vpack.c.b16 %v869, %v866
    %v1038 = vpack.c.b16 %v873, %v870
    %v1039 = vpack.c.b16 %v874, %v871
    %v1040 = vpack.c.b16 %v875, %v872
    %v1041 = vpack.c.b16 %v879, %v876
    %v1042 = vpack.c.b16 %v880, %v877
    %v1043 = vpack.c.b16 %v881, %v878
    %v1044 = vpack.c.b16 %v885, %v882
    %v1045 = vpack.c.b16 %v886, %v883
    %v1046 = vpack.c.b16 %v887, %v884
    %v1047 = vpack.c.b16 %v891, %v888
    %v1048 = vpack.c.b16 %v892, %v889
    %v1049 = vpack.c.b16 %v893, %v890
    %v1050 = vpack.c.b16 %v897, %v894
    %v1051 = vpack.c.b16 %v898, %v895
    %v1052 = vpack.c.b16 %v899, %v896
    %v1053 = vpack.c.b16 %v903, %v900
    %v1054 = vpack.c.b16 %v904, %v901
    %v1055 = vpack.c.b16 %v905, %v902
    %v1056 = vpack.c.b16 %v909, %v906
    %v1057 = vpack.c.b16 %v910, %v907
    %v1058 = vpack.c.b16 %v911, %v908
    %v1059 = vpack.c.b16 %v915, %v912
    %v1060 = vpack.c.b16 %v916, %v913
    %v1061 = vpack.c.b16 %v917, %v914
    %v1062 = vpack.c.b16 %v921, %v918
    %v1063 = vpack.c.b16 %v922, %v919
    %v1064 = vpack.c.b16 %v923, %v920
    %v1065 = vpack.c.b16 %v927, %v924
    %v1066 = vpack.c.b16 %v928, %v925
    %v1067 = vpack.c.b16 %v929, %v926
    %v1068 = vpack.c.b16 %v933, %v930
    %v1069 = vpack.c.b16 %v934, %v931
    %v1070 = vpack.c.b16 %v935, %v932
    %v1071 = vpack.c.b16 %v939, %v936
    %v1072 = vpack.c.b16 %v940, %v937
    %v1073 = vpack.c.b16 %v941, %v938
    %v1074 = vpack.c.b16 %v945, %v942
    %v1075 = vpack.c.b16 %v946, %v943
    %v1076 = vpack.c.b16 %v947, %v944
    %v1077 = vpack.c.b16 %v951, %v948
    %v1078 = vpack.c.b16 %v952, %v949
    %v1079 = vpack.c.b16 %v953, %v950
    %v1080 = vpack.c.b16 %v957, %v954
    %v1081 = vpack.c.b16 %v958, %v955
    %v1082 = vpack.c.b16 %v959, %v956
    %v1083 = vpack.c.b16 %v963, %v960
    %v1084 = vpack.c.b16 %v964, %v961
    %v1085 = vpack.c.b16 %v965, %v962
    %v1086 = vpack.c.b16 %v969, %v966
    %v1087 = vpack.c.b16 %v970, %v967
    %v1088 = vpack.c.b16 %v971, %v968
    %v1089 = vpack.c.b16 %v975, %v972
    %v1090 = vpack.c.b16 %v976, %v973
    %v1091 = vpack.c.b16 %v977, %v974
    %v1092 = vpack.c.b16 %v981, %v978
    %v1093 = vpack.c.b16 %v982, %v979
    %v1094 = vpack.c.b16 %v983, %v980
    %v1095 = vpack.c.b16 %v987, %v984
    %v1096 = vpack.c.b16 %v988, %v985
    %v1097 = vpack.c.b16 %v989, %v986
    %v1098 = vpack.c.b16 %v993, %v990
    %v1099 = vpack.c.b16 %v994, %v991
    %v1100 = vpack.c.b16 %v995, %v992
    %v1101 = vpack.c.b16 %v999, %v996
    %v1102 = vpack.c.b16 %v1000, %v997
    %v1103 = vpack.c.b16 %v1001, %v998
    %v1104 = vpack.c.b16 %v1005, %v1002
    %v1105 = vpack.c.b16 %v1006, %v1003
    %v1106 = vpack.c.b16 %v1007, %v1004
    %v1107 = vpack.c.b16 %v1011, %v1008
    %v1108 = vpack.c.b16 %v1012, %v1009
    %v1109 = vpack.c.b16 %v1013, %v1010
    %1206 = vmatprep.subr.bf16.mxu0 %v1015
    %1207 = vmatpush1.bf16.msra.mxu0 %v1014
    %1208 = vmatprep.subr.bf16.mxu0 %v1018
    %1209 = vmatpush1.bf16.msra.mxu0 %v1017
    %1210 = vmatprep.subr.bf16.mxu0 %v1021
    %1211 = vmatpush1.bf16.msra.mxu0 %v1020
    %1212 = vmatprep.subr.bf16.mxu0 %v1024
    %1213 = vmatpush1.bf16.msra.mxu0 %v1023
    %1214 = vmatprep.subr.bf16.mxu0 %v1027
    %1215 = vmatpush1.bf16.msra.mxu0 %v1026
    %1216 = vmatprep.subr.bf16.mxu0 %v1030
    %1217 = vmatpush1.bf16.msra.mxu0 %v1029
    %1218 = vmatprep.subr.bf16.mxu0 %v1033
    %1219 = vmatpush1.bf16.msra.mxu0 %v1032
    %1220 = vmatprep.subr.bf16.mxu0 %v1036
    %1221 = vmatpush1.bf16.msra.mxu0 %v1035
    %1222 = vmatprep.subr.bf16.mxu0 %v1039
    %1223 = vmatpush1.bf16.msra.mxu0 %v1038
    %1224 = vmatprep.subr.bf16.mxu0 %v1042
    %1225 = vmatpush1.bf16.msra.mxu0 %v1041
    %1226 = vmatprep.subr.bf16.mxu0 %v1045
    %1227 = vmatpush1.bf16.msra.mxu0 %v1044
    %1228 = vmatprep.subr.bf16.mxu0 %v1048
    %1229 = vmatpush1.bf16.msra.mxu0 %v1047
    %1230 = vmatprep.subr.bf16.mxu0 %v1051
    %1231 = vmatpush1.bf16.msra.mxu0 %v1050
    %1232 = vmatprep.subr.bf16.mxu0 %v1054
    %1233 = vmatpush1.bf16.msra.mxu0 %v1053
    %1234 = vmatprep.subr.bf16.mxu0 %v1057
    %1235 = vmatpush1.bf16.msra.mxu0 %v1056
    %1236 = vmatprep.subr.bf16.mxu0 %v1060
    %1237 = vmatpush1.bf16.msra.mxu0 %v1059
    %1238 = vmatprep.mubr.bf16.mxu0 %v518
    %1239 = vmatmul.mubr.bf16.gmra.mrb[0].mxu0 %v517
    %v1240 = vpop.f32.mrb[0].mxu0
    %v1241 = vadd.f32 %v682, %v1240
    %v1242 = vpop.f32.mrb[0].mxu0
    %v1243 = vadd.f32 %v686, %v1242
    %v1244 = vpop.f32.mrb[0].mxu0
    %v1245 = vadd.f32 %v682, %v1244
    %v1246 = vpop.f32.mrb[0].mxu0
    %v1247 = vadd.f32 %v686, %v1246
    %1248 = vmatprep.mubr.bf16.mxu0 %v522
    %1249 = vmatmul.mubr.bf16.gmra.mrb[0].mxu0 %v521
    %v1250 = vpop.f32.mrb[0].mxu0
    %v1251 = vadd.f32 %v682, %v1250
    %v1252 = vpop.f32.mrb[0].mxu0
    %v1253 = vadd.f32 %v686, %v1252
    %v1254 = vpop.f32.mrb[0].mxu0
    %v1255 = vadd.f32 %v682, %v1254
    %v1256 = vpop.f32.mrb[0].mxu0
    %v1257 = vadd.f32 %v686, %v1256
    %1258 = vmatprep.mubr.bf16.mxu0 %v526
    %1259 = vmatmul.mubr.bf16.gmra.mrb[0].mxu0 %v525
    %v1260 = vpop.f32.mrb[0].mxu0
    %v1261 = vadd.f32 %v682, %v1260
    %v1262 = vpop.f32.mrb[0].mxu0
    %v1263 = vadd.f32 %v686, %v1262
    %v1264 = vpop.f32.mrb[0].mxu0
    %v1265 = vadd.f32 %v682, %v1264
    %v1266 = vpop.f32.mrb[0].mxu0
    %v1267 = vadd.f32 %v686, %v1266
    %1268 = vmatprep.mubr.bf16.mxu0 %v530
    %1269 = vmatmul.mubr.bf16.gmra.mrb[0].mxu0 %v529
    %v1270 = vpop.f32.mrb[0].mxu0
    %v1271 = vadd.f32 %v682, %v1270
    %v1272 = vpop.f32.mrb[0].mxu0
    %v1273 = vadd.f32 %v686, %v1272
    %v1274 = vpop.f32.mrb[0].mxu0
    %v1275 = vadd.f32 %v682, %v1274
    %v1276 = vpop.f32.mrb[0].mxu0
    %v1277 = vadd.f32 %v686, %v1276
    %1278 = vmatprep.mubr.bf16.mxu0 %v534
    %1279 = vmatmul.mubr.bf16.gmra.mrb[0].mxu0 %v533
    %v1280 = vpop.f32.mrb[0].mxu0
    %v1281 = vadd.f32 %v682, %v1280
    %v1282 = vpop.f32.mrb[0].mxu0
    %v1283 = vadd.f32 %v686, %v1282
    %v1284 = vpop.f32.mrb[0].mxu0
    %v1285 = vadd.f32 %v682, %v1284
    %v1286 = vpop.f32.mrb[0].mxu0
    %v1287 = vadd.f32 %v686, %v1286
    %1288 = vmatprep.mubr.bf16.mxu0 %v538
    %1289 = vmatmul.mubr.bf16.gmra.mrb[0].mxu0 %v537
    %v1290 = vpop.f32.mrb[0].mxu0
    %v1291 = vadd.f32 %v682, %v1290
    %v1292 = vpop.f32.mrb[0].mxu0
    %v1293 = vadd.f32 %v686, %v1292
    %v1294 = vpop.f32.mrb[0].mxu0
    %v1295 = vadd.f32 %v682, %v1294
    %v1296 = vpop.f32.mrb[0].mxu0
    %v1297 = vadd.f32 %v686, %v1296
    %1298 = vmatprep.mubr.bf16.mxu0 %v542
    %1299 = vmatmul.mubr.bf16.gmra.mrb[0].mxu0 %v541
    %v1300 = vpop.f32.mrb[0].mxu0
    %v1301 = vadd.f32 %v682, %v1300
    %v1302 = vpop.f32.mrb[0].mxu0
    %v1303 = vadd.f32 %v686, %v1302
    %v1304 = vpop.f32.mrb[0].mxu0
    %v1305 = vadd.f32 %v682, %v1304
    %v1306 = vpop.f32.mrb[0].mxu0
    %v1307 = vadd.f32 %v686, %v1306
    %1308 = vmatprep.mubr.bf16.mxu0 %v546
    %1309 = vmatmul.mubr.bf16.gmra.mrb[0].mxu0 %v545
    %v1310 = vpop.f32.mrb[0].mxu0
    %v1311 = vadd.f32 %v682, %v1310
    %v1312 = vpop.f32.mrb[0].mxu0
    %v1313 = vadd.f32 %v686, %v1312
    %v1314 = vpop.f32.mrb[0].mxu0
    %v1315 = vadd.f32 %v682, %v1314
    %v1316 = vpop.f32.mrb[0].mxu0
    %v1317 = vadd.f32 %v686, %v1316
    %1318 = vdwg.mxu0
    %1319 = vmatprep.subr.bf16.mxu0 %v1063
    %1320 = vmatpush1.bf16.msra.mxu0 %v1062
    %1321 = vmatprep.subr.bf16.mxu0 %v1066
    %1322 = vmatpush1.bf16.msra.mxu0 %v1065
    %1323 = vmatprep.subr.bf16.mxu0 %v1069
    %1324 = vmatpush1.bf16.msra.mxu0 %v1068
    %1325 = vmatprep.subr.bf16.mxu0 %v1072
    %1326 = vmatpush1.bf16.msra.mxu0 %v1071
    %1327 = vmatprep.subr.bf16.mxu0 %v1075
    %1328 = vmatpush1.bf16.msra.mxu0 %v1074
    %1329 = vmatprep.subr.bf16.mxu0 %v1078
    %1330 = vmatpush1.bf16.msra.mxu0 %v1077
    %1331 = vmatprep.subr.bf16.mxu0 %v1081
    %1332 = vmatpush1.bf16.msra.mxu0 %v1080
    %1333 = vmatprep.subr.bf16.mxu0 %v1084
    %1334 = vmatpush1.bf16.msra.mxu0 %v1083
    %1335 = vmatprep.subr.bf16.mxu0 %v1087
    %1336 = vmatpush1.bf16.msra.mxu0 %v1086
    %1337 = vmatprep.subr.bf16.mxu0 %v1090
    %1338 = vmatpush1.bf16.msra.mxu0 %v1089
    %1339 = vmatprep.subr.bf16.mxu0 %v1093
    %1340 = vmatpush1.bf16.msra.mxu0 %v1092
    %1341 = vmatprep.subr.bf16.mxu0 %v1096
    %1342 = vmatpush1.bf16.msra.mxu0 %v1095
    %1343 = vmatprep.subr.bf16.mxu0 %v1099
    %1344 = vmatpush1.bf16.msra.mxu0 %v1098
    %1345 = vmatprep.subr.bf16.mxu0 %v1102
    %1346 = vmatpush1.bf16.msra.mxu0 %v1101
    %1347 = vmatprep.subr.bf16.mxu0 %v1105
    %1348 = vmatpush1.bf16.msra.mxu0 %v1104
    %1349 = vmatprep.subr.bf16.mxu0 %v1108
    %1350 = vmatpush1.bf16.msra.mxu0 %v1107
    %1351 = vmatprep.mubr.bf16.mxu0 %v520
    %1352 = vmatmul.mubr.bf16.gmra.mrb[0].mxu0 %v519
    %v1353 = vpop.f32.mrb[0].mxu0
    %v1354 = vadd.f32 %v1241, %v1353
    %v1355 = vpop.f32.mrb[0].mxu0
    %v1356 = vadd.f32 %v1243, %v1355
    %v1357 = vpop.f32.mrb[0].mxu0
    %v1358 = vadd.f32 %v1245, %v1357
    %v1359 = vpop.f32.mrb[0].mxu0
    %v1360 = vadd.f32 %v1247, %v1359
    %1361 = vmatprep.mubr.bf16.mxu0 %v524
    %1362 = vmatmul.mubr.bf16.gmra.mrb[0].mxu0 %v523
    %v1363 = vpop.f32.mrb[0].mxu0
    %v1364 = vadd.f32 %v1251, %v1363
    %v1365 = vpop.f32.mrb[0].mxu0
    %v1366 = vadd.f32 %v1253, %v1365
    %v1367 = vpop.f32.mrb[0].mxu0
    %v1368 = vadd.f32 %v1255, %v1367
    %v1369 = vpop.f32.mrb[0].mxu0
    %v1370 = vadd.f32 %v1257, %v1369
    %1371 = vmatprep.mubr.bf16.mxu0 %v528
    %1372 = vmatmul.mubr.bf16.gmra.mrb[0].mxu0 %v527
    %v1373 = vpop.f32.mrb[0].mxu0
    %v1374 = vadd.f32 %v1261, %v1373
    %v1375 = vpop.f32.mrb[0].mxu0
    %v1376 = vadd.f32 %v1263, %v1375
    %v1377 = vpop.f32.mrb[0].mxu0
    %v1378 = vadd.f32 %v1265, %v1377
    %v1379 = vpop.f32.mrb[0].mxu0
    %v1380 = vadd.f32 %v1267, %v1379
    %1381 = vmatprep.mubr.bf16.mxu0 %v532
    %1382 = vmatmul.mubr.bf16.gmra.mrb[0].mxu0 %v531
    %v1383 = vpop.f32.mrb[0].mxu0
    %v1384 = vadd.f32 %v1271, %v1383
    %v1385 = vpop.f32.mrb[0].mxu0
    %v1386 = vadd.f32 %v1273, %v1385
    %v1387 = vpop.f32.mrb[0].mxu0
    %v1388 = vadd.f32 %v1275, %v1387
    %v1389 = vpop.f32.mrb[0].mxu0
    %v1390 = vadd.f32 %v1277, %v1389
    %1391 = vmatprep.mubr.bf16.mxu0 %v536
    %1392 = vmatmul.mubr.bf16.gmra.mrb[0].mxu0 %v535
    %v1393 = vpop.f32.mrb[0].mxu0
    %v1394 = vadd.f32 %v1281, %v1393
    %v1395 = vpop.f32.mrb[0].mxu0
    %v1396 = vadd.f32 %v1283, %v1395
    %v1397 = vpop.f32.mrb[0].mxu0
    %v1398 = vadd.f32 %v1285, %v1397
    %v1399 = vpop.f32.mrb[0].mxu0
    %v1400 = vadd.f32 %v1287, %v1399
    %1401 = vmatprep.mubr.bf16.mxu0 %v540
    %1402 = vmatmul.mubr.bf16.gmra.mrb[0].mxu0 %v539
    %v1403 = vpop.f32.mrb[0].mxu0
    %v1404 = vadd.f32 %v1291, %v1403
    %v1405 = vpop.f32.mrb[0].mxu0
    %v1406 = vadd.f32 %v1293, %v1405
    %v1407 = vpop.f32.mrb[0].mxu0
    %v1408 = vadd.f32 %v1295, %v1407
    %v1409 = vpop.f32.mrb[0].mxu0
    %v1410 = vadd.f32 %v1297, %v1409
    %1411 = vmatprep.mubr.bf16.mxu0 %v544
    %1412 = vmatmul.mubr.bf16.gmra.mrb[0].mxu0 %v543
    %v1413 = vpop.f32.mrb[0].mxu0
    %v1414 = vadd.f32 %v1301, %v1413
    %v1415 = vpop.f32.mrb[0].mxu0
    %v1416 = vadd.f32 %v1303, %v1415
    %v1417 = vpop.f32.mrb[0].mxu0
    %v1418 = vadd.f32 %v1305, %v1417
    %v1419 = vpop.f32.mrb[0].mxu0
    %v1420 = vadd.f32 %v1307, %v1419
    %1421 = vmatprep.mubr.bf16.mxu0 %v548
    %1422 = vmatmul.mubr.bf16.gmra.mrb[0].mxu0 %v547
    %v1423 = vpop.f32.mrb[0].mxu0
    %v1424 = vadd.f32 %v1311, %v1423
    %v1425 = vpop.f32.mrb[0].mxu0
    %v1426 = vadd.f32 %v1313, %v1425
    %v1427 = vpop.f32.mrb[0].mxu0
    %v1428 = vadd.f32 %v1315, %v1427
    %v1429 = vpop.f32.mrb[0].mxu0
    %v1430 = vadd.f32 %v1317, %v1429
    %1431 = vdwg.mxu0
    %1432 = vmatprep.subr.bf16.mxu0 0
    %1433 = vmatpush1.bf16.msra.mxu0 %v1016
    %1434 = vmatprep.subr.bf16.mxu0 0
    %1435 = vmatpush1.bf16.msra.mxu0 %v1019
    %1436 = vmatprep.subr.bf16.mxu0 0
    %1437 = vmatpush1.bf16.msra.mxu0 %v1022
    %1438 = vmatprep.subr.bf16.mxu0 0
    %1439 = vmatpush1.bf16.msra.mxu0 %v1025
    %1440 = vmatprep.subr.bf16.mxu0 0
    %1441 = vmatpush1.bf16.msra.mxu0 %v1028
    %1442 = vmatprep.subr.bf16.mxu0 0
    %1443 = vmatpush1.bf16.msra.mxu0 %v1031
    %1444 = vmatprep.subr.bf16.mxu0 0
    %1445 = vmatpush1.bf16.msra.mxu0 %v1034
    %1446 = vmatprep.subr.bf16.mxu0 0
    %1447 = vmatpush1.bf16.msra.mxu0 %v1037
    %1448 = vmatprep.subr.bf16.mxu0 0
    %1449 = vmatpush1.bf16.msra.mxu0 %v1040
    %1450 = vmatprep.subr.bf16.mxu0 0
    %1451 = vmatpush1.bf16.msra.mxu0 %v1043
    %1452 = vmatprep.subr.bf16.mxu0 0
    %1453 = vmatpush1.bf16.msra.mxu0 %v1046
    %1454 = vmatprep.subr.bf16.mxu0 0
    %1455 = vmatpush1.bf16.msra.mxu0 %v1049
    %1456 = vmatprep.subr.bf16.mxu0 0
    %1457 = vmatpush1.bf16.msra.mxu0 %v1052
    %1458 = vmatprep.subr.bf16.mxu0 0
    %1459 = vmatpush1.bf16.msra.mxu0 %v1055
    %1460 = vmatprep.subr.bf16.mxu0 0
    %1461 = vmatpush1.bf16.msra.mxu0 %v1058
    %1462 = vmatprep.subr.bf16.mxu0 0
    %1463 = vmatpush1.bf16.msra.mxu0 %v1061
    %1464 = vmatprep.mubr.bf16.mxu0 %v518
    %1465 = vmatmul.mubr.bf16.gmra.mrb[0].mxu0 %v517
    %v1466 = vpop.f32.mrb[0].mxu0
    %v1467 = vadd.f32 %v690, %v1466
    %v1468 = vpop.f32.mrb[0].mxu0
    %v1469 = vpop.f32.mrb[0].mxu0
    %v1470 = vadd.f32 %v690, %v1469
    %v1471 = vpop.f32.mrb[0].mxu0
    %1472 = vmatprep.mubr.bf16.mxu0 %v522
    %1473 = vmatmul.mubr.bf16.gmra.mrb[0].mxu0 %v521
    %v1474 = vpop.f32.mrb[0].mxu0
    %v1475 = vadd.f32 %v690, %v1474
    %v1476 = vpop.f32.mrb[0].mxu0
    %v1477 = vpop.f32.mrb[0].mxu0
    %v1478 = vadd.f32 %v690, %v1477
    %v1479 = vpop.f32.mrb[0].mxu0
    %1480 = vmatprep.mubr.bf16.mxu0 %v526
    %1481 = vmatmul.mubr.bf16.gmra.mrb[0].mxu0 %v525
    %v1482 = vpop.f32.mrb[0].mxu0
    %v1483 = vadd.f32 %v690, %v1482
    %v1484 = vpop.f32.mrb[0].mxu0
    %v1485 = vpop.f32.mrb[0].mxu0
    %v1486 = vadd.f32 %v690, %v1485
    %v1487 = vpop.f32.mrb[0].mxu0
    %1488 = vmatprep.mubr.bf16.mxu0 %v530
    %1489 = vmatmul.mubr.bf16.gmra.mrb[0].mxu0 %v529
    %v1490 = vpop.f32.mrb[0].mxu0
    %v1491 = vadd.f32 %v690, %v1490
    %v1492 = vpop.f32.mrb[0].mxu0
    %v1493 = vpop.f32.mrb[0].mxu0
    %v1494 = vadd.f32 %v690, %v1493
    %v1495 = vpop.f32.mrb[0].mxu0
    %1496 = vmatprep.mubr.bf16.mxu0 %v534
    %1497 = vmatmul.mubr.bf16.gmra.mrb[0].mxu0 %v533
    %v1498 = vpop.f32.mrb[0].mxu0
    %v1499 = vadd.f32 %v690, %v1498
    %v1500 = vpop.f32.mrb[0].mxu0
    %v1501 = vpop.f32.mrb[0].mxu0
    %v1502 = vadd.f32 %v690, %v1501
    %v1503 = vpop.f32.mrb[0].mxu0
    %1504 = vmatprep.mubr.bf16.mxu0 %v538
    %1505 = vmatmul.mubr.bf16.gmra.mrb[0].mxu0 %v537
    %v1506 = vpop.f32.mrb[0].mxu0
    %v1507 = vadd.f32 %v690, %v1506
    %v1508 = vpop.f32.mrb[0].mxu0
    %v1509 = vpop.f32.mrb[0].mxu0
    %v1510 = vadd.f32 %v690, %v1509
    %v1511 = vpop.f32.mrb[0].mxu0
    %1512 = vmatprep.mubr.bf16.mxu0 %v542
    %1513 = vmatmul.mubr.bf16.gmra.mrb[0].mxu0 %v541
    %v1514 = vpop.f32.mrb[0].mxu0
    %v1515 = vadd.f32 %v690, %v1514
    %v1516 = vpop.f32.mrb[0].mxu0
    %v1517 = vpop.f32.mrb[0].mxu0
    %v1518 = vadd.f32 %v690, %v1517
    %v1519 = vpop.f32.mrb[0].mxu0
    %1520 = vmatprep.mubr.bf16.mxu0 %v546
    %1521 = vmatmul.mubr.bf16.gmra.mrb[0].mxu0 %v545
    %v1522 = vpop.f32.mrb[0].mxu0
    %v1523 = vadd.f32 %v690, %v1522
    %v1524 = vpop.f32.mrb[0].mxu0
    %v1525 = vpop.f32.mrb[0].mxu0
    %v1526 = vadd.f32 %v690, %v1525
    %v1527 = vpop.f32.mrb[0].mxu0
    %1528 = vdwg.mxu0
    %1529 = vmatprep.subr.bf16.mxu0 0
    %1530 = vmatpush1.bf16.msra.mxu0 %v1064
    %1531 = vmatprep.subr.bf16.mxu0 0
    %1532 = vmatpush1.bf16.msra.mxu0 %v1067
    %1533 = vmatprep.subr.bf16.mxu0 0
    %1534 = vmatpush1.bf16.msra.mxu0 %v1070
    %1535 = vmatprep.subr.bf16.mxu0 0
    %1536 = vmatpush1.bf16.msra.mxu0 %v1073
    %1537 = vmatprep.subr.bf16.mxu0 0
    %1538 = vmatpush1.bf16.msra.mxu0 %v1076
    %1539 = vmatprep.subr.bf16.mxu0 0
    %1540 = vmatpush1.bf16.msra.mxu0 %v1079
    %1541 = vmatprep.subr.bf16.mxu0 0
    %1542 = vmatpush1.bf16.msra.mxu0 %v1082
    %1543 = vmatprep.subr.bf16.mxu0 0
    %1544 = vmatpush1.bf16.msra.mxu0 %v1085
    %1545 = vmatprep.subr.bf16.mxu0 0
    %1546 = vmatpush1.bf16.msra.mxu0 %v1088
    %1547 = vmatprep.subr.bf16.mxu0 0
    %1548 = vmatpush1.bf16.msra.mxu0 %v1091
    %1549 = vmatprep.subr.bf16.mxu0 0
    %1550 = vmatpush1.bf16.msra.mxu0 %v1094
    %1551 = vmatprep.subr.bf16.mxu0 0
    %1552 = vmatpush1.bf16.msra.mxu0 %v1097
    %1553 = vmatprep.subr.bf16.mxu0 0
    %1554 = vmatpush1.bf16.msra.mxu0 %v1100
    %1555 = vmatprep.subr.bf16.mxu0 0
    %1556 = vmatpush1.bf16.msra.mxu0 %v1103
    %1557 = vmatprep.subr.bf16.mxu0 0
    %1558 = vmatpush1.bf16.msra.mxu0 %v1106
    %1559 = vmatprep.subr.bf16.mxu0 0
    %1560 = vmatpush1.bf16.msra.mxu0 %v1109
    %1561 = vmatprep.mubr.bf16.mxu0 %v520
    %1562 = vmatmul.mubr.bf16.gmra.mrb[0].mxu0 %v519
    %v1563 = vpop.f32.mrb[0].mxu0
    %v1564 = vadd.f32 %v1467, %v1563
    %v1565 = vpop.f32.mrb[0].mxu0
    %v1566 = vpop.f32.mrb[0].mxu0
    %v1567 = vadd.f32 %v1470, %v1566
    %v1568 = vpop.f32.mrb[0].mxu0
    %1569 = vmatprep.mubr.bf16.mxu0 %v524
    %1570 = vmatmul.mubr.bf16.gmra.mrb[0].mxu0 %v523
    %v1571 = vpop.f32.mrb[0].mxu0
    %v1572 = vadd.f32 %v1475, %v1571
    %v1573 = vpop.f32.mrb[0].mxu0
    %v1574 = vpop.f32.mrb[0].mxu0
    %v1575 = vadd.f32 %v1478, %v1574
    %v1576 = vpop.f32.mrb[0].mxu0
    %1577 = vmatprep.mubr.bf16.mxu0 %v528
    %1578 = vmatmul.mubr.bf16.gmra.mrb[0].mxu0 %v527
    %v1579 = vpop.f32.mrb[0].mxu0
    %v1580 = vadd.f32 %v1483, %v1579
    %v1581 = vpop.f32.mrb[0].mxu0
    %v1582 = vpop.f32.mrb[0].mxu0
    %v1583 = vadd.f32 %v1486, %v1582
    %v1584 = vpop.f32.mrb[0].mxu0
    %1585 = vmatprep.mubr.bf16.mxu0 %v532
    %1586 = vmatmul.mubr.bf16.gmra.mrb[0].mxu0 %v531
    %v1587 = vpop.f32.mrb[0].mxu0
    %v1588 = vadd.f32 %v1491, %v1587
    %v1589 = vpop.f32.mrb[0].mxu0
    %v1590 = vpop.f32.mrb[0].mxu0
    %v1591 = vadd.f32 %v1494, %v1590
    %v1592 = vpop.f32.mrb[0].mxu0
    %1593 = vmatprep.mubr.bf16.mxu0 %v536
    %1594 = vmatmul.mubr.bf16.gmra.mrb[0].mxu0 %v535
    %v1595 = vpop.f32.mrb[0].mxu0
    %v1596 = vadd.f32 %v1499, %v1595
    %v1597 = vpop.f32.mrb[0].mxu0
    %v1598 = vpop.f32.mrb[0].mxu0
    %v1599 = vadd.f32 %v1502, %v1598
    %v1600 = vpop.f32.mrb[0].mxu0
    %1601 = vmatprep.mubr.bf16.mxu0 %v540
    %1602 = vmatmul.mubr.bf16.gmra.mrb[0].mxu0 %v539
    %v1603 = vpop.f32.mrb[0].mxu0
    %v1604 = vadd.f32 %v1507, %v1603
    %v1605 = vpop.f32.mrb[0].mxu0
    %v1606 = vpop.f32.mrb[0].mxu0
    %v1607 = vadd.f32 %v1510, %v1606
    %v1608 = vpop.f32.mrb[0].mxu0
    %1609 = vmatprep.mubr.bf16.mxu0 %v544
    %1610 = vmatmul.mubr.bf16.gmra.mrb[0].mxu0 %v543
    %v1611 = vpop.f32.mrb[0].mxu0
    %v1612 = vadd.f32 %v1515, %v1611
    %v1613 = vpop.f32.mrb[0].mxu0
    %v1614 = vpop.f32.mrb[0].mxu0
    %v1615 = vadd.f32 %v1518, %v1614
    %v1616 = vpop.f32.mrb[0].mxu0
    %1617 = vmatprep.mubr.bf16.mxu0 %v548
    %1618 = vmatmul.mubr.bf16.gmra.mrb[0].mxu0 %v547
    %v1619 = vpop.f32.mrb[0].mxu0
    %v1620 = vadd.f32 %v1523, %v1619
    %v1621 = vpop.f32.mrb[0].mxu0
    %v1622 = vpop.f32.mrb[0].mxu0
    %v1623 = vadd.f32 %v1526, %v1622
    %v1624 = vpop.f32.mrb[0].mxu0
    %1625 = vdwg.mxu0
    %v1626 = vmax.f32 %v1354, 0.0
    %v1627 = vmax.f32 %v1356, 0.0
    %v1628 = vmax.f32 %v1564, 0.0
    %v1629 = vmax.f32 %v1358, 0.0
    %v1630 = vmax.f32 %v1360, 0.0
    %v1631 = vmax.f32 %v1567, 0.0
    %v1632 = vmax.f32 %v1364, 0.0
    %v1633 = vmax.f32 %v1366, 0.0
    %v1634 = vmax.f32 %v1572, 0.0
    %v1635 = vmax.f32 %v1368, 0.0
    %v1636 = vmax.f32 %v1370, 0.0
    %v1637 = vmax.f32 %v1575, 0.0
    %v1638 = vmax.f32 %v1374, 0.0
    %v1639 = vmax.f32 %v1376, 0.0
    %v1640 = vmax.f32 %v1580, 0.0
    %v1641 = vmax.f32 %v1378, 0.0
    %v1642 = vmax.f32 %v1380, 0.0
    %v1643 = vmax.f32 %v1583, 0.0
    %v1644 = vmax.f32 %v1384, 0.0
    %v1645 = vmax.f32 %v1386, 0.0
    %v1646 = vmax.f32 %v1588, 0.0
    %v1647 = vmax.f32 %v1388, 0.0
    %v1648 = vmax.f32 %v1390, 0.0
    %v1649 = vmax.f32 %v1591, 0.0
    %v1650 = vmax.f32 %v1394, 0.0
    %v1651 = vmax.f32 %v1396, 0.0
    %v1652 = vmax.f32 %v1596, 0.0
    %v1653 = vmax.f32 %v1398, 0.0
    %v1654 = vmax.f32 %v1400, 0.0
    %v1655 = vmax.f32 %v1599, 0.0
    %v1656 = vmax.f32 %v1404, 0.0
    %v1657 = vmax.f32 %v1406, 0.0
    %v1658 = vmax.f32 %v1604, 0.0
    %v1659 = vmax.f32 %v1408, 0.0
    %v1660 = vmax.f32 %v1410, 0.0
    %v1661 = vmax.f32 %v1607, 0.0
    %v1662 = vmax.f32 %v1414, 0.0
    %v1663 = vmax.f32 %v1416, 0.0
    %v1664 = vmax.f32 %v1612, 0.0
    %v1665 = vmax.f32 %v1418, 0.0
    %v1666 = vmax.f32 %v1420, 0.0
    %v1667 = vmax.f32 %v1615, 0.0
    %v1668 = vmax.f32 %v1424, 0.0
    %v1669 = vmax.f32 %v1426, 0.0
    %v1670 = vmax.f32 %v1620, 0.0
    %v1671 = vmax.f32 %v1428, 0.0
    %v1672 = vmax.f32 %v1430, 0.0
    %v1673 = vmax.f32 %v1623, 0.0
    %v1674 = vpack.c.bf16 %v1629, %v1626
    %v1675 = vpack.c.bf16 %v1630, %v1627
    %v1676 = vpack.c.bf16 %v1631, %v1628
    %v1677 = vpack.c.bf16 %v1635, %v1632
    %v1678 = vpack.c.bf16 %v1636, %v1633
    %v1679 = vpack.c.bf16 %v1637, %v1634
    %v1680 = vpack.c.bf16 %v1641, %v1638
    %v1681 = vpack.c.bf16 %v1642, %v1639
    %v1682 = vpack.c.bf16 %v1643, %v1640
    %v1683 = vpack.c.bf16 %v1647, %v1644
    %v1684 = vpack.c.bf16 %v1648, %v1645
    %v1685 = vpack.c.bf16 %v1649, %v1646
    %v1686 = vpack.c.bf16 %v1653, %v1650
    %v1687 = vpack.c.bf16 %v1654, %v1651
    %v1688 = vpack.c.bf16 %v1655, %v1652
    %v1689 = vpack.c.bf16 %v1659, %v1656
    %v1690 = vpack.c.bf16 %v1660, %v1657
    %v1691 = vpack.c.bf16 %v1661, %v1658
    %v1692 = vpack.c.bf16 %v1665, %v1662
    %v1693 = vpack.c.bf16 %v1666, %v1663
    %v1694 = vpack.c.bf16 %v1667, %v1664
    %v1695 = vpack.c.bf16 %v1671, %v1668
    %v1696 = vpack.c.bf16 %v1672, %v1669
    %v1697 = vpack.c.bf16 %v1673, %v1670
    %1698 = vst [vmem:[#allocation3] sm:$0xff] %v1674
    %1699 = vst [vmem:[#allocation3 + $0x8] sm:$0xff] %v1675
    %1700 = vst [vmem:[#allocation3 + $0x10] sm:$0xff] %v1676
    %1701 = vst [vmem:[#allocation3 + $0x18] sm:$0xff] %v1677
    %1702 = vst [vmem:[#allocation3 + $0x20] sm:$0xff] %v1678
    %1703 = vst [vmem:[#allocation3 + $0x28] sm:$0xff] %v1679
    %1704 = vst [vmem:[#allocation3 + $0x30] sm:$0xff] %v1680
    %1705 = vst [vmem:[#allocation3 + $0x38] sm:$0xff] %v1681
    %1706 = vst [vmem:[#allocation3 + $0x40] sm:$0xff] %v1682
    %1707 = vst [vmem:[#allocation3 + $0x48] sm:$0xff] %v1683
    %1708 = vst [vmem:[#allocation3 + $0x50] sm:$0xff] %v1684
    %1709 = vst [vmem:[#allocation3 + $0x58] sm:$0xff] %v1685
    %1710 = vst [vmem:[#allocation3 + $0x60] sm:$0xff] %v1686
    %1711 = vst [vmem:[#allocation3 + $0x68] sm:$0xff] %v1687
    %1712 = vst [vmem:[#allocation3 + $0x70] sm:$0xff] %v1688
    %1713 = vst [vmem:[#allocation3 + $0x78] sm:$0xff] %v1689
    %1714 = vst [vmem:[#allocation3 + $0x80] sm:$0xff] %v1690
    %1715 = vst [vmem:[#allocation3 + $0x88] sm:$0xff] %v1691
    %1716 = vst [vmem:[#allocation3 + $0x90] sm:$0xff] %v1692
    %1717 = vst [vmem:[#allocation3 + $0x98] sm:$0xff] %v1693
    %1718 = vst [vmem:[#allocation3 + $0xa0] sm:$0xff] %v1694
    %1719 = vst [vmem:[#allocation3 + $0xa8] sm:$0xff] %v1695
    %1720 = vst [vmem:[#allocation3 + $0xb0] sm:$0xff] %v1696
    %1721 = vst [vmem:[#allocation3 + $0xb8] sm:$0xff] %v1697
    %v1722 = vld [vmem:[#allocation3] sm:$0xff]
    %v1723 = vld [vmem:[#allocation3 + $0x8] sm:$0xff]
    %v1724 = vld [vmem:[#allocation3 + $0x10] sm:$0xff]
    %v1725 = vld [vmem:[#allocation3 + $0x18] sm:$0xff]
    %v1726 = vld [vmem:[#allocation3 + $0x20] sm:$0xff]
    %v1727 = vld [vmem:[#allocation3 + $0x28] sm:$0xff]
    %v1728 = vld [vmem:[#allocation3 + $0x30] sm:$0xff]
    %v1729 = vld [vmem:[#allocation3 + $0x38] sm:$0xff]
    %v1730 = vld [vmem:[#allocation3 + $0x40] sm:$0xff]
    %v1731 = vld [vmem:[#allocation3 + $0x48] sm:$0xff]
    %v1732 = vld [vmem:[#allocation3 + $0x50] sm:$0xff]
    %v1733 = vld [vmem:[#allocation3 + $0x58] sm:$0xff]
    %v1734 = vld [vmem:[#allocation3 + $0x60] sm:$0xff]
    %v1735 = vld [vmem:[#allocation3 + $0x68] sm:$0xff]
    %v1736 = vld [vmem:[#allocation3 + $0x70] sm:$0xff]
    %v1737 = vld [vmem:[#allocation3 + $0x78] sm:$0xff]
    %v1738 = vld [vmem:[#allocation3 + $0x80] sm:$0xff]
    %v1739 = vld [vmem:[#allocation3 + $0x88] sm:$0xff]
    %v1740 = vld [vmem:[#allocation3 + $0x90] sm:$0xff]
    %v1741 = vld [vmem:[#allocation3 + $0x98] sm:$0xff]
    %v1742 = vld [vmem:[#allocation3 + $0xa0] sm:$0xff]
    %v1743 = vld [vmem:[#allocation3 + $0xa8] sm:$0xff]
    %v1744 = vld [vmem:[#allocation3 + $0xb0] sm:$0xff]
    %v1745 = vld [vmem:[#allocation3 + $0xb8] sm:$0xff]
    %v1746 = vld [vmem:[#allocation7] sm:$0xf]
    %v1747 = vld [vmem:[#allocation7 + $0x4] sm:$0xf]
    %v1748 = vld [vmem:[#allocation7 + $0x8] sm:$0xf]
    %v1749 = vld [vmem:[#allocation7 + $0xc] sm:$0xf]
    %v1750 = vld [vmem:[#allocation7 + $0x10] sm:$0xf]
    %v1751 = vld [vmem:[#allocation7 + $0x14] sm:$0xf]
    %v1752 = vld [vmem:[#allocation7 + $0x18] sm:$0xf]
    %v1753 = vld [vmem:[#allocation7 + $0x1c] sm:$0xf]
    %v1754 = vld [vmem:[#allocation7 + $0x20] sm:$0xf]
    %v1755 = vld [vmem:[#allocation7 + $0x24] sm:$0xf]
    %v1756 = vld [vmem:[#allocation7 + $0x28] sm:$0xf]
    %v1757 = vld [vmem:[#allocation7 + $0x2c] sm:$0xf]
    %v1758 = vld [vmem:[#allocation7 + $0x30] sm:$0xf]
    %v1759 = vld [vmem:[#allocation7 + $0x34] sm:$0xf]
    %v1760 = vld [vmem:[#allocation7 + $0x38] sm:$0xf]
    %v1761 = vld [vmem:[#allocation7 + $0x3c] sm:$0xf]
    %v1762 = vld [vmem:[#allocation7 + $0x40] sm:$0xf]
    %v1763 = vld [vmem:[#allocation7 + $0x44] sm:$0xf]
    %v1764 = vld [vmem:[#allocation7 + $0x48] sm:$0xf]
    %v1765 = vld [vmem:[#allocation7 + $0x4c] sm:$0xf]
    %v1766 = vld [vmem:[#allocation7 + $0x50] sm:$0xf]
    %v1767 = vld [vmem:[#allocation7 + $0x54] sm:$0xf]
    %v1768 = vld [vmem:[#allocation7 + $0x58] sm:$0xf]
    %v1769 = vld [vmem:[#allocation7 + $0x5c] sm:$0xf]
    %v1770 = vld [vmem:[#allocation7 + $0x60] sm:$0xf]
    %v1771 = vld [vmem:[#allocation7 + $0x64] sm:$0xf]
    %v1772 = vld [vmem:[#allocation7 + $0x68] sm:$0xf]
    %v1773 = vld [vmem:[#allocation7 + $0x6c] sm:$0xf]
    %v1774 = vld [vmem:[#allocation7 + $0x70] sm:$0xf]
    %v1775 = vld [vmem:[#allocation7 + $0x74] sm:$0xf]
    %v1776 = vld [vmem:[#allocation7 + $0x78] sm:$0xf]
    %v1777 = vld [vmem:[#allocation7 + $0x7c] sm:$0xf]
    %v1778 = vld [vmem:[#allocation7 + $0x80] sm:$0xf]
    %v1779 = vld [vmem:[#allocation7 + $0x84] sm:$0xf]
    %v1780 = vld [vmem:[#allocation7 + $0x88] sm:$0xf]
    %v1781 = vld [vmem:[#allocation7 + $0x8c] sm:$0xf]
    %v1782 = vld [vmem:[#allocation7 + $0x90] sm:$0xf]
    %v1783 = vld [vmem:[#allocation7 + $0x94] sm:$0xf]
    %v1784 = vld [vmem:[#allocation7 + $0x98] sm:$0xf]
    %v1785 = vld [vmem:[#allocation7 + $0x9c] sm:$0xf]
    %v1786 = vld [vmem:[#allocation7 + $0xa0] sm:$0xf]
    %v1787 = vld [vmem:[#allocation7 + $0xa4] sm:$0xf]
    %v1788 = vld [vmem:[#allocation7 + $0xa8] sm:$0xf]
    %v1789 = vld [vmem:[#allocation7 + $0xac] sm:$0xf]
    %v1790 = vld [vmem:[#allocation7 + $0xb0] sm:$0xf]
    %v1791 = vld [vmem:[#allocation7 + $0xb4] sm:$0xf]
    %v1792 = vld [vmem:[#allocation7 + $0xb8] sm:$0xf]
    %v1793 = vld [vmem:[#allocation7 + $0xbc] sm:$0xf]
    %v1842 = vunpack.c.l.b16 %v1746
    %v1843 = vunpack.c.l.b16 %v1747
    %v1844 = vunpack.c.l.b16 %v1748
    %v1845 = vunpack.c.l.b16 %v1749
    %v1846 = vunpack.c.l.b16 %v1750
    %v1847 = vunpack.c.l.b16 %v1751
    %v1848 = vunpack.c.l.b16 %v1752
    %v1849 = vunpack.c.l.b16 %v1753
    %v1850 = vunpack.c.l.b16 %v1754
    %v1851 = vunpack.c.l.b16 %v1755
    %v1852 = vunpack.c.l.b16 %v1756
    %v1853 = vunpack.c.l.b16 %v1757
    %v1854 = vunpack.c.l.b16 %v1758
    %v1855 = vunpack.c.l.b16 %v1759
    %v1856 = vunpack.c.l.b16 %v1760
    %v1857 = vunpack.c.l.b16 %v1761
    %v1858 = vunpack.c.l.b16 %v1762
    %v1859 = vunpack.c.l.b16 %v1763
    %v1860 = vunpack.c.l.b16 %v1764
    %v1861 = vunpack.c.l.b16 %v1765
    %v1862 = vunpack.c.l.b16 %v1766
    %v1863 = vunpack.c.l.b16 %v1767
    %v1864 = vunpack.c.l.b16 %v1768
    %v1865 = vunpack.c.l.b16 %v1769
    %v1866 = vunpack.c.l.b16 %v1770
    %v1867 = vunpack.c.l.b16 %v1771
    %v1868 = vunpack.c.l.b16 %v1772
    %v1869 = vunpack.c.l.b16 %v1773
    %v1870 = vunpack.c.l.b16 %v1774
    %v1871 = vunpack.c.l.b16 %v1775
    %v1872 = vunpack.c.l.b16 %v1776
    %v1873 = vunpack.c.l.b16 %v1777
    %v1874 = vunpack.c.l.b16 %v1778
    %v1875 = vunpack.c.l.b16 %v1779
    %v1876 = vunpack.c.l.b16 %v1780
    %v1877 = vunpack.c.l.b16 %v1781
    %v1878 = vunpack.c.l.b16 %v1782
    %v1879 = vunpack.c.l.b16 %v1783
    %v1880 = vunpack.c.l.b16 %v1784
    %v1881 = vunpack.c.l.b16 %v1785
    %v1882 = vunpack.c.l.b16 %v1786
    %v1883 = vunpack.c.l.b16 %v1787
    %v1884 = vunpack.c.l.b16 %v1788
    %v1885 = vunpack.c.l.b16 %v1789
    %v1886 = vunpack.c.l.b16 %v1790
    %v1887 = vunpack.c.l.b16 %v1791
    %v1888 = vunpack.c.l.b16 %v1792
    %v1889 = vunpack.c.l.b16 %v1793
    %v1890 = vpack.c.b16 %v1843, %v1842
    %v1891 = vpack.c.b16 %v1845, %v1844
    %v1892 = vpack.c.b16 %v1847, %v1846
    %v1893 = vpack.c.b16 %v1849, %v1848
    %v1894 = vpack.c.b16 %v1851, %v1850
    %v1895 = vpack.c.b16 %v1853, %v1852
    %v1896 = vpack.c.b16 %v1855, %v1854
    %v1897 = vpack.c.b16 %v1857, %v1856
    %v1898 = vpack.c.b16 %v1859, %v1858
    %v1899 = vpack.c.b16 %v1861, %v1860
    %v1900 = vpack.c.b16 %v1863, %v1862
    %v1901 = vpack.c.b16 %v1865, %v1864
    %v1902 = vpack.c.b16 %v1867, %v1866
    %v1903 = vpack.c.b16 %v1869, %v1868
    %v1904 = vpack.c.b16 %v1871, %v1870
    %v1905 = vpack.c.b16 %v1873, %v1872
    %v1906 = vpack.c.b16 %v1875, %v1874
    %v1907 = vpack.c.b16 %v1877, %v1876
    %v1908 = vpack.c.b16 %v1879, %v1878
    %v1909 = vpack.c.b16 %v1881, %v1880
    %v1910 = vpack.c.b16 %v1883, %v1882
    %v1911 = vpack.c.b16 %v1885, %v1884
    %v1912 = vpack.c.b16 %v1887, %v1886
    %v1913 = vpack.c.b16 %v1889, %v1888
    %1938 = vmatprep.subr.bf16.mxu0 0
    %1939 = vmatpush1.bf16.msra.mxu0 %v1890
    %1940 = vmatprep.subr.bf16.mxu0 0
    %1941 = vmatpush1.bf16.msra.mxu0 %v1891
    %1942 = vmatprep.subr.bf16.mxu0 0
    %1943 = vmatpush1.bf16.msra.mxu0 %v1892
    %1944 = vmatprep.subr.bf16.mxu0 0
    %1945 = vmatpush1.bf16.msra.mxu0 %v1893
    %1946 = vmatprep.subr.bf16.mxu0 0
    %1947 = vmatpush1.bf16.msra.mxu0 %v1894
    %1948 = vmatprep.subr.bf16.mxu0 0
    %1949 = vmatpush1.bf16.msra.mxu0 %v1895
    %1950 = vmatprep.subr.bf16.mxu0 0
    %1951 = vmatpush1.bf16.msra.mxu0 %v1896
    %1952 = vmatprep.subr.bf16.mxu0 0
    %1953 = vmatpush1.bf16.msra.mxu0 %v1897
    %1954 = vmatprep.subr.bf16.mxu0 0
    %1955 = vmatpush1.bf16.msra.mxu0 %v1898
    %1956 = vmatprep.subr.bf16.mxu0 0
    %1957 = vmatpush1.bf16.msra.mxu0 %v1899
    %1958 = vmatprep.subr.bf16.mxu0 0
    %1959 = vmatpush1.bf16.msra.mxu0 %v1900
    %1960 = vmatprep.subr.bf16.mxu0 0
    %1961 = vmatpush1.bf16.msra.mxu0 %v1901
    %1962 = vmatprep.subr.bf16.mxu0 0
    %1963 = vmatpush1.bf16.msra.mxu0 %v1902
    %1964 = vmatprep.subr.bf16.mxu0 0
    %1965 = vmatpush1.bf16.msra.mxu0 %v1903
    %1966 = vmatprep.subr.bf16.mxu0 0
    %1967 = vmatpush1.bf16.msra.mxu0 %v1904
    %1968 = vmatprep.subr.bf16.mxu0 0
    %1969 = vmatpush1.bf16.msra.mxu0 %v1905
    %1970 = vmatprep.mubr.bf16.mxu0 %v1723
    %1971 = vmatmul.mubr.bf16.gmra.mrb[0].mxu0 %v1722
    %v1972 = vpop.f32.mrb[0].mxu0
    %v1973 = vadd.f32 0.0, %v1972
    %v1974 = vpop.f32.mrb[0].mxu0
    %v1975 = vpop.f32.mrb[0].mxu0
    %v1976 = vadd.f32 0.0, %v1975
    %v1977 = vpop.f32.mrb[0].mxu0
    %1978 = vmatprep.mubr.bf16.mxu0 %v1726
    %1979 = vmatmul.mubr.bf16.gmra.mrb[0].mxu0 %v1725
    %v1980 = vpop.f32.mrb[0].mxu0
    %v1981 = vadd.f32 0.0, %v1980
    %v1982 = vpop.f32.mrb[0].mxu0
    %v1983 = vpop.f32.mrb[0].mxu0
    %v1984 = vadd.f32 0.0, %v1983
    %v1985 = vpop.f32.mrb[0].mxu0
    %1986 = vmatprep.mubr.bf16.mxu0 %v1729
    %1987 = vmatmul.mubr.bf16.gmra.mrb[0].mxu0 %v1728
    %v1988 = vpop.f32.mrb[0].mxu0
    %v1989 = vadd.f32 0.0, %v1988
    %v1990 = vpop.f32.mrb[0].mxu0
    %v1991 = vpop.f32.mrb[0].mxu0
    %v1992 = vadd.f32 0.0, %v1991
    %v1993 = vpop.f32.mrb[0].mxu0
    %1994 = vmatprep.mubr.bf16.mxu0 %v1732
    %1995 = vmatmul.mubr.bf16.gmra.mrb[0].mxu0 %v1731
    %v1996 = vpop.f32.mrb[0].mxu0
    %v1997 = vadd.f32 0.0, %v1996
    %v1998 = vpop.f32.mrb[0].mxu0
    %v1999 = vpop.f32.mrb[0].mxu0
    %v2000 = vadd.f32 0.0, %v1999
    %v2001 = vpop.f32.mrb[0].mxu0
    %2002 = vmatprep.mubr.bf16.mxu0 %v1735
    %2003 = vmatmul.mubr.bf16.gmra.mrb[0].mxu0 %v1734
    %v2004 = vpop.f32.mrb[0].mxu0
    %v2005 = vadd.f32 0.0, %v2004
    %v2006 = vpop.f32.mrb[0].mxu0
    %v2007 = vpop.f32.mrb[0].mxu0
    %v2008 = vadd.f32 0.0, %v2007
    %v2009 = vpop.f32.mrb[0].mxu0
    %2010 = vmatprep.mubr.bf16.mxu0 %v1738
    %2011 = vmatmul.mubr.bf16.gmra.mrb[0].mxu0 %v1737
    %v2012 = vpop.f32.mrb[0].mxu0
    %v2013 = vadd.f32 0.0, %v2012
    %v2014 = vpop.f32.mrb[0].mxu0
    %v2015 = vpop.f32.mrb[0].mxu0
    %v2016 = vadd.f32 0.0, %v2015
    %v2017 = vpop.f32.mrb[0].mxu0
    %2018 = vmatprep.mubr.bf16.mxu0 %v1741
    %2019 = vmatmul.mubr.bf16.gmra.mrb[0].mxu0 %v1740
    %v2020 = vpop.f32.mrb[0].mxu0
    %v2021 = vadd.f32 0.0, %v2020
    %v2022 = vpop.f32.mrb[0].mxu0
    %v2023 = vpop.f32.mrb[0].mxu0
    %v2024 = vadd.f32 0.0, %v2023
    %v2025 = vpop.f32.mrb[0].mxu0
    %2026 = vmatprep.mubr.bf16.mxu0 %v1744
    %2027 = vmatmul.mubr.bf16.gmra.mrb[0].mxu0 %v1743
    %v2028 = vpop.f32.mrb[0].mxu0
    %v2029 = vadd.f32 0.0, %v2028
    %v2030 = vpop.f32.mrb[0].mxu0
    %v2031 = vpop.f32.mrb[0].mxu0
    %v2032 = vadd.f32 0.0, %v2031
    %v2033 = vpop.f32.mrb[0].mxu0
    %2034 = vdwg.mxu0
    %2035 = vmatprep.subr.bf16.mxu0 0
    %2036 = vmatpush1.bf16.msra.mxu0 %v1906
    %2037 = vmatprep.subr.bf16.mxu0 0
    %2038 = vmatpush1.bf16.msra.mxu0 %v1907
    %2039 = vmatprep.subr.bf16.mxu0 0
    %2040 = vmatpush1.bf16.msra.mxu0 %v1908
    %2041 = vmatprep.subr.bf16.mxu0 0
    %2042 = vmatpush1.bf16.msra.mxu0 %v1909
    %2043 = vmatprep.subr.bf16.mxu0 0
    %2044 = vmatpush1.bf16.msra.mxu0 %v1910
    %2045 = vmatprep.subr.bf16.mxu0 0
    %2046 = vmatpush1.bf16.msra.mxu0 %v1911
    %2047 = vmatprep.subr.bf16.mxu0 0
    %2048 = vmatpush1.bf16.msra.mxu0 %v1912
    %2049 = vmatprep.subr.bf16.mxu0 0
    %2050 = vmatpush1.bf16.msra.mxu0 %v1913
    %2051 = vmatprep.subr.bf16.mxu0 0
    %2052 = vmatpush1.bf16.msra.mxu0 0
    %2053 = vmatprep.subr.bf16.mxu0 0
    %2054 = vmatpush1.bf16.msra.mxu0 0
    %2055 = vmatprep.subr.bf16.mxu0 0
    %2056 = vmatpush1.bf16.msra.mxu0 0
    %2057 = vmatprep.subr.bf16.mxu0 0
    %2058 = vmatpush1.bf16.msra.mxu0 0
    %2059 = vmatprep.subr.bf16.mxu0 0
    %2060 = vmatpush1.bf16.msra.mxu0 0
    %2061 = vmatprep.subr.bf16.mxu0 0
    %2062 = vmatpush1.bf16.msra.mxu0 0
    %2063 = vmatprep.subr.bf16.mxu0 0
    %2064 = vmatpush1.bf16.msra.mxu0 0
    %2065 = vmatprep.subr.bf16.mxu0 0
    %2066 = vmatpush1.bf16.msra.mxu0 0
    %2067 = vmatprep.mubr.bf16.mxu0 0
    %2068 = vmatmul.mubr.bf16.gmra.mrb[0].mxu0 %v1724
    %v2069 = vpop.f32.mrb[0].mxu0
    %v2070 = vadd.f32 %v1973, %v2069
    %v2071 = vpop.f32.mrb[0].mxu0
    %v2072 = vpop.f32.mrb[0].mxu0
    %v2073 = vadd.f32 %v1976, %v2072
    %v2074 = vpop.f32.mrb[0].mxu0
    %2075 = vmatprep.mubr.bf16.mxu0 0
    %2076 = vmatmul.mubr.bf16.gmra.mrb[0].mxu0 %v1727
    %v2077 = vpop.f32.mrb[0].mxu0
    %v2078 = vadd.f32 %v1981, %v2077
    %v2079 = vpop.f32.mrb[0].mxu0
    %v2080 = vpop.f32.mrb[0].mxu0
    %v2081 = vadd.f32 %v1984, %v2080
    %v2082 = vpop.f32.mrb[0].mxu0
    %2083 = vmatprep.mubr.bf16.mxu0 0
    %2084 = vmatmul.mubr.bf16.gmra.mrb[0].mxu0 %v1730
    %v2085 = vpop.f32.mrb[0].mxu0
    %v2086 = vadd.f32 %v1989, %v2085
    %v2087 = vpop.f32.mrb[0].mxu0
    %v2088 = vpop.f32.mrb[0].mxu0
    %v2089 = vadd.f32 %v1992, %v2088
    %v2090 = vpop.f32.mrb[0].mxu0
    %2091 = vmatprep.mubr.bf16.mxu0 0
    %2092 = vmatmul.mubr.bf16.gmra.mrb[0].mxu0 %v1733
    %v2093 = vpop.f32.mrb[0].mxu0
    %v2094 = vadd.f32 %v1997, %v2093
    %v2095 = vpop.f32.mrb[0].mxu0
    %v2096 = vpop.f32.mrb[0].mxu0
    %v2097 = vadd.f32 %v2000, %v2096
    %v2098 = vpop.f32.mrb[0].mxu0
    %2099 = vmatprep.mubr.bf16.mxu0 0
    %2100 = vmatmul.mubr.bf16.gmra.mrb[0].mxu0 %v1736
    %v2101 = vpop.f32.mrb[0].mxu0
    %v2102 = vadd.f32 %v2005, %v2101
    %v2103 = vpop.f32.mrb[0].mxu0
    %v2104 = vpop.f32.mrb[0].mxu0
    %v2105 = vadd.f32 %v2008, %v2104
    %v2106 = vpop.f32.mrb[0].mxu0
    %2107 = vmatprep.mubr.bf16.mxu0 0
    %2108 = vmatmul.mubr.bf16.gmra.mrb[0].mxu0 %v1739
    %v2109 = vpop.f32.mrb[0].mxu0
    %v2110 = vadd.f32 %v2013, %v2109
    %v2111 = vpop.f32.mrb[0].mxu0
    %v2112 = vpop.f32.mrb[0].mxu0
    %v2113 = vadd.f32 %v2016, %v2112
    %v2114 = vpop.f32.mrb[0].mxu0
    %2115 = vmatprep.mubr.bf16.mxu0 0
    %2116 = vmatmul.mubr.bf16.gmra.mrb[0].mxu0 %v1742
    %v2117 = vpop.f32.mrb[0].mxu0
    %v2118 = vadd.f32 %v2021, %v2117
    %v2119 = vpop.f32.mrb[0].mxu0
    %v2120 = vpop.f32.mrb[0].mxu0
    %v2121 = vadd.f32 %v2024, %v2120
    %v2122 = vpop.f32.mrb[0].mxu0
    %2123 = vmatprep.mubr.bf16.mxu0 0
    %2124 = vmatmul.mubr.bf16.gmra.mrb[0].mxu0 %v1745
    %v2125 = vpop.f32.mrb[0].mxu0
    %v2126 = vadd.f32 %v2029, %v2125
    %v2127 = vpop.f32.mrb[0].mxu0
    %v2128 = vpop.f32.mrb[0].mxu0
    %v2129 = vadd.f32 %v2032, %v2128
    %v2130 = vpop.f32.mrb[0].mxu0
    %2131 = vdwg.mxu0
    %v2132 = vld [vmem:[#allocation4] sm:$0x1]
    %v2134 = vlaneseq
    %v2135 = vshrl.u32 %v2134, 7
    %v2136 = vsub.s32 0, %v2135
    %v2137 = vrot.slane %v2132, %v2136
    %v2139 = vadd.f32 %v2070, %v2137
    %v2140 = vadd.f32 %v2073, %v2137
    %v2141 = vadd.f32 %v2078, %v2137
    %v2142 = vadd.f32 %v2081, %v2137
    %v2143 = vadd.f32 %v2086, %v2137
    %v2144 = vadd.f32 %v2089, %v2137
    %v2145 = vadd.f32 %v2094, %v2137
    %v2146 = vadd.f32 %v2097, %v2137
    %v2147 = vadd.f32 %v2102, %v2137
    %v2148 = vadd.f32 %v2105, %v2137
    %v2149 = vadd.f32 %v2110, %v2137
    %v2150 = vadd.f32 %v2113, %v2137
    %v2151 = vadd.f32 %v2118, %v2137
    %v2152 = vadd.f32 %v2121, %v2137
    %v2153 = vadd.f32 %v2126, %v2137
    %v2154 = vadd.f32 %v2129, %v2137
    %v2155 = vtanh.pop %v2139
    %v2156 = vtanh.pop %v2140
    %v2157 = vtanh.pop %v2141
    %v2158 = vtanh.pop %v2142
    %v2159 = vtanh.pop %v2143
    %v2160 = vtanh.pop %v2144
    %v2161 = vtanh.pop %v2145
    %v2162 = vtanh.pop %v2146
    %v2163 = vtanh.pop %v2147
    %v2164 = vtanh.pop %v2148
    %v2165 = vtanh.pop %v2149
    %v2166 = vtanh.pop %v2150
    %v2167 = vtanh.pop %v2151
    %v2168 = vtanh.pop %v2152
    %v2169 = vtanh.pop %v2153
    %v2170 = vtanh.pop %v2154
    %vm2171 = vcmask 7168
    %2172 = vst.msk [vmem:[%s7] sm:$0xff] %vm2171, %v2155
    %2173 = vst.msk [vmem:[%s7 + $0x8] sm:$0xff] %vm2171, %v2156
    %2174 = vst.msk [vmem:[%s7 + $0x10] sm:$0xff] %vm2171, %v2157
    %2175 = vst.msk [vmem:[%s7 + $0x18] sm:$0xff] %vm2171, %v2158
    %2176 = vst.msk [vmem:[%s7 + $0x20] sm:$0xff] %vm2171, %v2159
    %2177 = vst.msk [vmem:[%s7 + $0x28] sm:$0xff] %vm2171, %v2160
    %2178 = vst.msk [vmem:[%s7 + $0x30] sm:$0xff] %vm2171, %v2161
    %2179 = vst.msk [vmem:[%s7 + $0x38] sm:$0xff] %vm2171, %v2162
    %2180 = vst.msk [vmem:[%s7 + $0x40] sm:$0xff] %vm2171, %v2163
    %2181 = vst.msk [vmem:[%s7 + $0x48] sm:$0xff] %vm2171, %v2164
    %2182 = vst.msk [vmem:[%s7 + $0x50] sm:$0xff] %vm2171, %v2165
    %2183 = vst.msk [vmem:[%s7 + $0x58] sm:$0xff] %vm2171, %v2166
    %2184 = vst.msk [vmem:[%s7 + $0x60] sm:$0xff] %vm2171, %v2167
    %2185 = vst.msk [vmem:[%s7 + $0x68] sm:$0xff] %vm2171, %v2168
    %2186 = vst.msk [vmem:[%s7 + $0x70] sm:$0xff] %vm2171, %v2169
    %2187 = vst.msk [vmem:[%s7 + $0x78] sm:$0xff] %vm2171, %v2170
    // Predicated region
    $region38: #{actor_forward.1} parent=1 // pred_check
      _
    $region39: #{actor_forward.1} parent=1 // pred_check_branch
      %2189 = sbr.rel (0) target = $region41
    $region40: #{actor_forward.1} parent=1 // pred_region
      _
    $region41: #{actor_forward.1} parent=1 // pred_fallthru
      _
    // Predicated region
    $region42: #{actor_forward.1} parent=1 // pred_check
      _
    $region43: #{actor_forward.1} parent=1 // pred_check_branch
      %2191 = sbr.rel (0) target = $region45
    $region44: #{actor_forward.1} parent=1 // pred_region
      _
    $region45: #{actor_forward.1} parent=1 // pred_fallthru
      _
    %2192 = vsyncpa [#allocation6], 1
    %2193 = vsyncpa [#allocation8], 1

</llo_original>
